<compile_context>
chip_gen: v7x
topology: tpu7x:2x2x1
jax: 0.10.0
libtpu: 0.0.40
codegen_flags: <defaults>
</compile_context>

<pallas_src>
import functools

import numpy as np

import jax
import jax.numpy as jnp
from jax.experimental import pallas as pl
from jax.experimental.pallas import tpu as pltpu


# ---------------------------------------------------------------------------
# Host-side constant "plumbing" matrices (tiny numpy / einsum).  They encode
# the conv's W/C band mixing, the pool decimations and the GAP+FC projection so
# that the kernel body is only: roll (XLU), mask/max/add (VPU), matmul (MXU).
# ---------------------------------------------------------------------------

def _conv_band_matrices(w_conv, width):
    """Pack a PyTorch-layout (Cout, Cin, 3, 3) conv weight into 3 banded matrices
    M[kh] of shape (width*Cin, width*Cout) such that, for the activation layout
    A[r, w*Cin + ci] (r = row within an image):

        conv3x3_pad1(A)[r, w*Cout+co] = sum_kh (A_shifted_by_(kh-1) @ M[kh])[r, w*Cout+co]

    'Same' zero padding along W is handled by band clipping; padding along H is
    handled in-kernel by the boundary mask on the rolled rows."""
    cout, cin, _, _ = w_conv.shape
    d = np.zeros((3, width, width), np.float32)           # D[kw, wi, w] = 1 iff wi == w+kw-1
    for kw in range(3):
        for w in range(width):
            wi = w + kw - 1
            if 0 <= wi < width:
                d[kw, wi, w] = 1.0
    wt = jnp.transpose(w_conv, (2, 3, 1, 0))              # (kh, kw, Cin, Cout)
    m = jnp.einsum("kuw,hkio->huiwo", jnp.asarray(d), wt)  # (kh, wi, ci, w, co)
    return m.reshape(3, width * cin, width * cout)


def _pool_row_decimate(b, h_in):
    """(b*h_in/2, b*h_in): picks row r = bi*h_in + 2*ho of the row-maxed array."""
    h_out = h_in // 2
    m = np.zeros((b * h_out, b * h_in), np.float32)
    for bi in range(b):
        for ho in range(h_out):
            m[bi * h_out + ho, bi * h_in + 2 * ho] = 1.0
    return m


def _pool_row_decimate_sum(b, h_in):
    """(b, b*h_in): picks the even rows AND sums them per sample (pool2 + GAP-H)."""
    h_out = h_in // 2
    m = np.zeros((b, b * h_in), np.float32)
    for bi in range(b):
        for ho in range(h_out):
            m[bi, bi * h_in + 2 * ho] = 1.0
    return m


def _pool_col_decimate(w_in, c):
    """(w_in*c, (w_in/2)*c): picks lane (2*wo)*c + ch of the lane-maxed array."""
    w_out = w_in // 2
    m = np.zeros((w_in * c, w_out * c), np.float32)
    for wo in range(w_out):
        for ch in range(c):
            m[(2 * wo) * c + ch, wo * c + ch] = 1.0
    return m


def _chan_sum(w, c):
    """(w*c, c): sums over the W positions of the (rows, W*C) layout."""
    m = np.zeros((w * c, c), np.float32)
    for wi in range(w):
        for ch in range(c):
            m[wi * c + ch, ch] = 1.0
    return m


# ---------------------------------------------------------------------------
# The fused Pallas kernel: one grid step == B_TILE batch elements.
# Activation layout: rows = (sample, image-row) on sublanes, lanes = W*C.
# ---------------------------------------------------------------------------

def _cnn_fused_kernel(x_ref, m1_ref, b1_ref, cdec1_ref, rdec1_ref,
                      m2_ref, b2_ref, cdec2_ref, rsdec2_ref, proj_ref, bfc_ref,
                      o_ref, *, h1, h2, c1, c2):
    f32 = jnp.float32

    def conv3x3_relu(a, m_ref, b_ref, rows_per_img):
        # 3x3 'same' conv + bias + ReLU.  Row shifts via XLU roll + boundary
        # mask (zero-padding along H); W/C mixing via 3 banded MXU matmuls.
        m_rows = a.shape[0]
        ridx = jax.lax.broadcasted_iota(jnp.int32, (m_rows, 1), 0)
        hpos = ridx % rows_per_img
        up_ok = (hpos > 0).astype(f32)                    # row r-1 stays in this image
        dn_ok = (hpos < rows_per_img - 1).astype(f32)     # row r+1 stays in this image
        a_up = pltpu.roll(a, shift=1, axis=0) * up_ok             # A[r-1], zero at h==0
        a_dn = pltpu.roll(a, shift=m_rows - 1, axis=0) * dn_ok    # A[r+1], zero at h==H-1
        acc = jnp.dot(a_up, m_ref[0], preferred_element_type=f32)
        acc = acc + jnp.dot(a, m_ref[1], preferred_element_type=f32)
        acc = acc + jnp.dot(a_dn, m_ref[2], preferred_element_type=f32)
        return jnp.maximum(acc + b_ref[...], 0.0)

    def pool_pair_max(a, c):
        # 2x2 window max (no decimation yet): row-pair max then lane(W)-pair max.
        m_rows, wc = a.shape
        v = jnp.maximum(a, pltpu.roll(a, shift=m_rows - 1, axis=0))  # max(A[r], A[r+1])
        return jnp.maximum(v, pltpu.roll(v, shift=wc - c, axis=1))   # max over the W pair

    x = x_ref[...]                                                   # (B*H,   W*Cin)

    y1 = conv3x3_relu(x, m1_ref, b1_ref, h1)                         # (B*H,   W*C1)
    u1 = pool_pair_max(y1, c1)
    p1 = jnp.dot(rdec1_ref[...],
                 jnp.dot(u1, cdec1_ref[...], preferred_element_type=f32),
                 preferred_element_type=f32)                         # (B*H/2, W/2*C1)

    y2 = conv3x3_relu(p1, m2_ref, b2_ref, h2)                        # (B*H/2, W/2*C2)
    u2 = pool_pair_max(y2, c2)
    # pool2 row-decimation + per-sample GAP row-sum fused into one 0/1 matmul.
    sums = jnp.dot(rsdec2_ref[...],
                   jnp.dot(u2, cdec2_ref[...], preferred_element_type=f32),
                   preferred_element_type=f32)                       # (B, W/4*C2)

    # GAP over W + 1/(H2*W2) + FC weight are folded into proj; bias added last.
    out = jnp.dot(sums, proj_ref[...], preferred_element_type=f32) + bfc_ref[...]
    o_ref[...] = out.astype(o_ref.dtype)                             # (B, NC_PAD) lane-dense


# ---------------------------------------------------------------------------
# Wrapper: layout repack + constant packing + single pallas_call.
# ---------------------------------------------------------------------------

def cnn_forward(x_nchw, params, *, b_tile=None):
    n, cin, h, w = x_nchw.shape
    assert h % 4 == 0 and w % 4 == 0, "H and W must be divisible by 4 (two 2x2 pools)"
    c1 = params["b1"].shape[0]
    c2 = params["b2"].shape[0]
    nc = params["bf"].shape[0]
    ho, wo = h // 2, w // 2
    h2, w2 = ho // 2, wo // 2
    nc_pad = max(128, ((nc + 127) // 128) * 128)          # lane-dense output slab

    if b_tile is None:
        # Target ~256 stacked rows per grid step (v6e/v7x MXU fill; 2x the v5e fill).
        b_tile = max(1, min(n, max(1, 256 // h)))
        if b_tile < n and b_tile % 8 != 0:
            b_tile = min(n, 8)                            # keep output block sublane-aligned
        # TODO(synk): on v7x with small batches prefer b_tile = ceil(n/2) so both
        # TensorCores get a grid step (dimension_semantics=("parallel",)).
    n_pad = ((n + b_tile - 1) // b_tile) * b_tile

    # NCHW -> lane-dense (N*H, W*Cin): channels innermost on the lane axis.
    # (single wrapper-side transpose; negligible at these sizes)
    xt = jnp.transpose(x_nchw, (0, 2, 3, 1)).astype(jnp.float32)     # (N, H, W, Cin)
    if n_pad != n:
        xt = jnp.pad(xt, ((0, n_pad - n), (0, 0), (0, 0), (0, 0)))
    x2d = xt.reshape(n_pad * h, w * cin)

    # Packed conv weights + constant decimation / projection matrices (all f32, < 1 MiB).
    m1 = _conv_band_matrices(params["w1"].astype(jnp.float32), w)    # (3, W*Cin,  W*C1)
    m2 = _conv_band_matrices(params["w2"].astype(jnp.float32), wo)   # (3, Wo*C1, Wo*C2)
    b1t = jnp.tile(params["b1"].astype(jnp.float32), w).reshape(1, w * c1)
    b2t = jnp.tile(params["b2"].astype(jnp.float32), wo).reshape(1, wo * c2)
    cdec1 = jnp.asarray(_pool_col_decimate(w, c1))                   # (W*C1,  Wo*C1)
    cdec2 = jnp.asarray(_pool_col_decimate(wo, c2))                  # (Wo*C2, W2*C2)
    rdec1 = jnp.asarray(_pool_row_decimate(b_tile, h))               # (B*Ho,  B*H)
    rsdec2 = jnp.asarray(_pool_row_decimate_sum(b_tile, ho))         # (B,     B*Ho)
    csum = jnp.asarray(_chan_sum(w2, c2))                            # (W2*C2, C2)
    proj = jnp.dot(csum, params["wf"].astype(jnp.float32).T) * (1.0 / float(h2 * w2))
    proj = jnp.pad(proj, ((0, 0), (0, nc_pad - nc)))                 # (W2*C2, NC_PAD)
    bfc = jnp.pad(params["bf"].astype(jnp.float32).reshape(1, nc),
                  ((0, 0), (0, nc_pad - nc)))                        # (1, NC_PAD)

    consts = (m1, b1t, cdec1, rdec1, m2, b2t, cdec2, rsdec2, proj, bfc)

    def _const_spec(a):
        nd = a.ndim
        return pl.BlockSpec(a.shape, lambda i, nd=nd: (0,) * nd)     # fetched once

    # Advisory cost estimate (helps XLA schedule around the custom call).
    m1_rows, m2_rows = b_tile * h, b_tile * ho
    steps = n_pad // b_tile
    flops = steps * (
        2 * 3 * m1_rows * (w * cin) * (w * c1)
        + 2 * m1_rows * (w * c1) * (wo * c1)
        + 2 * (m1_rows // 2) * m1_rows * (wo * c1)
        + 2 * 3 * m2_rows * (wo * c1) * (wo * c2)
        + 2 * m2_rows * (wo * c2) * (w2 * c2)
        + 2 * b_tile * m2_rows * (w2 * c2)
        + 2 * b_tile * (w2 * c2) * nc_pad)
    bytes_acc = (x2d.size + n_pad * nc_pad
                 + sum(int(np.prod(a.shape)) for a in consts)) * 4
    cost = pl.CostEstimate(flops=int(flops), transcendentals=0,
                           bytes_accessed=int(bytes_acc))

    kernel = functools.partial(_cnn_fused_kernel, h1=h, h2=ho, c1=c1, c2=c2)
    out_pad = pl.pallas_call(
        kernel,
        out_shape=jax.ShapeDtypeStruct((n_pad, nc_pad), jnp.float32),
        grid=(n_pad // b_tile,),
        in_specs=[pl.BlockSpec((b_tile * h, w * cin), lambda i: (i, 0))]
                 + [_const_spec(a) for a in consts],
        out_specs=pl.BlockSpec((b_tile, nc_pad), lambda i: (i, 0)),
        compiler_params=pltpu.CompilerParams(
            dimension_semantics=("parallel",)),
        cost_estimate=cost,
    )(x2d, *consts)

    return out_pad[:n, :nc]


# ---------------------------------------------------------------------------
# Parameters (PyTorch layouts, PyTorch-default uniform init bounds)
# ---------------------------------------------------------------------------

def init_params(key, in_channels, num_classes):
    def uniform(k, shape, fan_in):
        bound = 1.0 / float(np.sqrt(fan_in))
        return jax.random.uniform(k, shape, jnp.float32, -bound, bound)

    k = jax.random.split(key, 6)
    fan1 = in_channels * 9
    fan2 = 8 * 9
    return dict(
        w1=uniform(k[0], (8, in_channels, 3, 3), fan1), b1=uniform(k[1], (8,), fan1),
        w2=uniform(k[2], (32, 8, 3, 3), fan2),          b2=uniform(k[3], (32,), fan2),
        wf=uniform(k[4], (num_classes, 32), 32),        bf=uniform(k[5], (num_classes,), 32),
    )


# ---------------------------------------------------------------------------
# Pure-JAX reference (XLA) for a correctness sanity check.
# ---------------------------------------------------------------------------

def cnn_reference(x_nchw, params):
    prec = jax.lax.Precision.HIGHEST
    x = x_nchw.astype(jnp.float32)

    def conv_relu(a, wt, b):
        y = jax.lax.conv_general_dilated(
            a, wt, window_strides=(1, 1), padding=((1, 1), (1, 1)),
            dimension_numbers=("NCHW", "OIHW", "NCHW"), precision=prec)
        return jax.nn.relu(y + b.reshape(1, -1, 1, 1))

    def pool(a):
        nn_, cc_, hh, ww = a.shape
        return a.reshape(nn_, cc_, hh // 2, 2, ww // 2, 2).max(axis=(3, 5))

    y = pool(conv_relu(x, params["w1"], params["b1"]))
    y = pool(conv_relu(y, params["w2"], params["b2"]))
    feat = jnp.mean(y, axis=(2, 3))
    return jnp.dot(feat, params["wf"].T, precision=prec) + params["bf"]


# ---------------------------------------------------------------------------

if __name__ == "__main__":
    in_channels, num_classes = 4, 10
    batch, height, width = 2, 16, 16

    key = jax.random.PRNGKey(0)
    k_x, k_p = jax.random.split(key)
    x = jax.random.normal(k_x, (batch, in_channels, height, width), jnp.float32)
    params = init_params(k_p, in_channels, num_classes)

    out = jax.jit(cnn_forward)(x, params)
    jax.block_until_ready(out)
    assert out.shape == (batch, num_classes), out.shape
    assert out.dtype == jnp.float32

    # Sanity check vs plain XLA (loose tolerance: MXU default-precision matmuls).
    ref = jax.jit(cnn_reference)(x, params)
    err = float(jnp.max(jnp.abs(out - ref)))
    assert err < 2e-2, f"max abs error vs reference = {err}"

    print("KERNEL_OK")
</pallas_src>

<mosaic_0001>
module attributes {stable_mosaic.version = 11 : i64} {
  func.func @_cnn_fused_kernel(%arg0: i32, %arg1: memref<32x64xf32, #tpu.memory_space<vmem>>, %arg2: memref<3x64x128xf32, #tpu.memory_space<vmem>>, %arg3: memref<1x128xf32, #tpu.memory_space<vmem>>, %arg4: memref<128x64xf32, #tpu.memory_space<vmem>>, %arg5: memref<16x32xf32, #tpu.memory_space<vmem>>, %arg6: memref<3x64x256xf32, #tpu.memory_space<vmem>>, %arg7: memref<1x256xf32, #tpu.memory_space<vmem>>, %arg8: memref<256x128xf32, #tpu.memory_space<vmem>>, %arg9: memref<2x16xf32, #tpu.memory_space<vmem>>, %arg10: memref<128x128xf32, #tpu.memory_space<vmem>>, %arg11: memref<1x128xf32, #tpu.memory_space<vmem>>, %arg12: memref<2x128xf32, #tpu.memory_space<vmem>>) attributes {dimension_semantics = [#tpu.dimension_semantics<parallel>], iteration_bounds = array<i64: 1>, scalar_prefetch = 0 : i64, scratch_operands = 0 : i64, tpu.core_type = #tpu.core_type<tc>, window_params = [{transform_indices = @transform_0, window_bounds = array<i64: 32, 64>}, {pipeline_mode = #tpu.pipeline_mode<synchronous>, transform_indices = @transform_1, window_bounds = array<i64: 3, 64, 128>}, {pipeline_mode = #tpu.pipeline_mode<synchronous>, transform_indices = @transform_2, window_bounds = array<i64: 1, 128>}, {pipeline_mode = #tpu.pipeline_mode<synchronous>, transform_indices = @transform_3, window_bounds = array<i64: 128, 64>}, {pipeline_mode = #tpu.pipeline_mode<synchronous>, transform_indices = @transform_4, window_bounds = array<i64: 16, 32>}, {pipeline_mode = #tpu.pipeline_mode<synchronous>, transform_indices = @transform_5, window_bounds = array<i64: 3, 64, 256>}, {pipeline_mode = #tpu.pipeline_mode<synchronous>, transform_indices = @transform_6, window_bounds = array<i64: 1, 256>}, {pipeline_mode = #tpu.pipeline_mode<synchronous>, transform_indices = @transform_7, window_bounds = array<i64: 256, 128>}, {pipeline_mode = #tpu.pipeline_mode<synchronous>, transform_indices = @transform_8, window_bounds = array<i64: 2, 16>}, {pipeline_mode = #tpu.pipeline_mode<synchronous>, transform_indices = @transform_9, window_bounds = array<i64: 128, 128>}, {pipeline_mode = #tpu.pipeline_mode<synchronous>, transform_indices = @transform_10, window_bounds = array<i64: 1, 128>}, {transform_indices = @transform_11, window_bounds = array<i64: 2, 128>}]} {
    %c0 = arith.constant 0 : index
    %c0_0 = arith.constant 0 : index
    %0 = vector.load %arg1[%c0, %c0_0] : memref<32x64xf32, #tpu.memory_space<vmem>>, vector<32x64xf32>
    %1 = tpu.iota {dimensions = array<i32: 0>} : vector<32x1xi32>
    %c16_i32 = arith.constant 16 : i32
    %c0_i32 = arith.constant 0 : i32
    %2 = arith.cmpi eq, %c16_i32, %c0_i32 : i32
    %c1_i32 = arith.constant 1 : i32
    %3 = arith.select %2, %c1_i32, %c16_i32 : i32
    %4 = vector.broadcast %3 : i32 to vector<32x1xi32>
    %5 = arith.remsi %1, %4 : vector<32x1xi32>
    %c0_i32_1 = arith.constant 0 : i32
    %6 = vector.broadcast %c0_i32_1 : i32 to vector<32x1xi32>
    %7 = arith.cmpi ne, %5, %6 : vector<32x1xi32>
    %c0_i32_2 = arith.constant 0 : i32
    %8 = vector.broadcast %c0_i32_2 : i32 to vector<32x1xi32>
    %9 = arith.cmpi slt, %5, %8 : vector<32x1xi32>
    %c0_i32_3 = arith.constant 0 : i32
    %10 = arith.cmpi slt, %3, %c0_i32_3 : i32
    %11 = vector.broadcast %10 : i1 to vector<32x1xi1>
    %12 = vector.broadcast %11 : vector<32x1xi1> to vector<32x1xi1>
    %13 = arith.xori %9, %12 : vector<32x1xi1>
    %14 = arith.andi %13, %7 : vector<32x1xi1>
    %15 = vector.broadcast %3 : i32 to vector<32x1xi32>
    %16 = arith.addi %5, %15 : vector<32x1xi32>
    %17 = arith.select %14, %16, %5 : vector<32x1xi1>, vector<32x1xi32>
    %c0_i32_4 = arith.constant 0 : i32
    %18 = vector.broadcast %c0_i32_4 : i32 to vector<32x1xi32>
    %19 = arith.cmpi sgt, %17, %18 : vector<32x1xi32>
    %20 = arith.extui %19 : vector<32x1xi1> to vector<32x1xi32>
    %21 = arith.sitofp %20 : vector<32x1xi32> to vector<32x1xf32>
    %c15_i32 = arith.constant 15 : i32
    %22 = vector.broadcast %c15_i32 : i32 to vector<32x1xi32>
    %23 = arith.cmpi slt, %17, %22 : vector<32x1xi32>
    %24 = arith.extui %23 : vector<32x1xi1> to vector<32x1xi32>
    %25 = arith.sitofp %24 : vector<32x1xi32> to vector<32x1xf32>
    %c1_i32_5 = arith.constant 1 : i32
    %26 = tpu.dynamic_rotate %0 by %c1_i32_5 dim 0 : vector<32x64xf32>, i32 -> vector<32x64xf32>
    %27 = vector.broadcast %21 : vector<32x1xf32> to vector<32x64xf32>
    %28 = arith.mulf %26, %27 : vector<32x64xf32>
    %c31_i32 = arith.constant 31 : i32
    %29 = tpu.dynamic_rotate %0 by %c31_i32 dim 0 : vector<32x64xf32>, i32 -> vector<32x64xf32>
    %30 = vector.broadcast %25 : vector<32x1xf32> to vector<32x64xf32>
    %31 = arith.mulf %29, %30 : vector<32x64xf32>
    %c0_6 = arith.constant 0 : index
    %c0_7 = arith.constant 0 : index
    %c0_8 = arith.constant 0 : index
    %32 = vector.load %arg2[%c0_6, %c0_7, %c0_8] : memref<3x64x128xf32, #tpu.memory_space<vmem>>, vector<1x64x128xf32>
    %33 = vector.shape_cast %32 : vector<1x64x128xf32> to vector<64x128xf32>
    %cst = arith.constant dense<0.000000e+00> : vector<32x128xf32>
    %34 = tpu.matmul %28, %33, %cst {dimension_numbers = #tpu.dot_dimension_numbers<[1], [0], [0], [1], [0, 0, 1, 1], [], []>} : vector<32x64xf32>, vector<64x128xf32>, vector<32x128xf32> -> vector<32x128xf32>
    %c1 = arith.constant 1 : index
    %c0_9 = arith.constant 0 : index
    %c0_10 = arith.constant 0 : index
    %35 = vector.load %arg2[%c1, %c0_9, %c0_10] : memref<3x64x128xf32, #tpu.memory_space<vmem>>, vector<1x64x128xf32>
    %36 = vector.shape_cast %35 : vector<1x64x128xf32> to vector<64x128xf32>
    %cst_11 = arith.constant dense<0.000000e+00> : vector<32x128xf32>
    %37 = tpu.matmul %0, %36, %cst_11 {dimension_numbers = #tpu.dot_dimension_numbers<[1], [0], [0], [1], [0, 0, 1, 1], [], []>} : vector<32x64xf32>, vector<64x128xf32>, vector<32x128xf32> -> vector<32x128xf32>
    %38 = arith.addf %34, %37 : vector<32x128xf32>
    %c2 = arith.constant 2 : index
    %c0_12 = arith.constant 0 : index
    %c0_13 = arith.constant 0 : index
    %39 = vector.load %arg2[%c2, %c0_12, %c0_13] : memref<3x64x128xf32, #tpu.memory_space<vmem>>, vector<1x64x128xf32>
    %40 = vector.shape_cast %39 : vector<1x64x128xf32> to vector<64x128xf32>
    %cst_14 = arith.constant dense<0.000000e+00> : vector<32x128xf32>
    %41 = tpu.matmul %31, %40, %cst_14 {dimension_numbers = #tpu.dot_dimension_numbers<[1], [0], [0], [1], [0, 0, 1, 1], [], []>} : vector<32x64xf32>, vector<64x128xf32>, vector<32x128xf32> -> vector<32x128xf32>
    %42 = arith.addf %38, %41 : vector<32x128xf32>
    %c0_15 = arith.constant 0 : index
    %c0_16 = arith.constant 0 : index
    %43 = vector.load %arg3[%c0_15, %c0_16] : memref<1x128xf32, #tpu.memory_space<vmem>>, vector<1x128xf32>
    %44 = vector.broadcast %43 : vector<1x128xf32> to vector<32x128xf32>
    %45 = arith.addf %42, %44 : vector<32x128xf32>
    %cst_17 = arith.constant 0.000000e+00 : f32
    %46 = vector.broadcast %cst_17 : f32 to vector<32x128xf32>
    %47 = arith.maximumf %45, %46 : vector<32x128xf32>
    %c31_i32_18 = arith.constant 31 : i32
    %48 = tpu.dynamic_rotate %47 by %c31_i32_18 dim 0 : vector<32x128xf32>, i32 -> vector<32x128xf32>
    %49 = arith.maximumf %47, %48 : vector<32x128xf32>
    %c120_i32 = arith.constant 120 : i32
    %50 = tpu.dynamic_rotate %49 by %c120_i32 dim 1 : vector<32x128xf32>, i32 -> vector<32x128xf32>
    %51 = arith.maximumf %49, %50 : vector<32x128xf32>
    %c0_19 = arith.constant 0 : index
    %c0_20 = arith.constant 0 : index
    %52 = vector.load %arg5[%c0_19, %c0_20] : memref<16x32xf32, #tpu.memory_space<vmem>>, vector<16x32xf32>
    %c0_21 = arith.constant 0 : index
    %c0_22 = arith.constant 0 : index
    %53 = vector.load %arg4[%c0_21, %c0_22] : memref<128x64xf32, #tpu.memory_space<vmem>>, vector<128x64xf32>
    %cst_23 = arith.constant dense<0.000000e+00> : vector<32x64xf32>
    %54 = tpu.matmul %51, %53, %cst_23 {dimension_numbers = #tpu.dot_dimension_numbers<[1], [0], [0], [1], [0, 0, 1, 1], [], []>} : vector<32x128xf32>, vector<128x64xf32>, vector<32x64xf32> -> vector<32x64xf32>
    %cst_24 = arith.constant dense<0.000000e+00> : vector<16x64xf32>
    %55 = tpu.matmul %52, %54, %cst_24 {dimension_numbers = #tpu.dot_dimension_numbers<[1], [0], [0], [1], [0, 0, 1, 1], [], []>} : vector<16x32xf32>, vector<32x64xf32>, vector<16x64xf32> -> vector<16x64xf32>
    %56 = tpu.iota {dimensions = array<i32: 0>} : vector<16x1xi32>
    %c8_i32 = arith.constant 8 : i32
    %c0_i32_25 = arith.constant 0 : i32
    %57 = arith.cmpi eq, %c8_i32, %c0_i32_25 : i32
    %c1_i32_26 = arith.constant 1 : i32
    %58 = arith.select %57, %c1_i32_26, %c8_i32 : i32
    %59 = vector.broadcast %58 : i32 to vector<16x1xi32>
    %60 = arith.remsi %56, %59 : vector<16x1xi32>
    %c0_i32_27 = arith.constant 0 : i32
    %61 = vector.broadcast %c0_i32_27 : i32 to vector<16x1xi32>
    %62 = arith.cmpi ne, %60, %61 : vector<16x1xi32>
    %c0_i32_28 = arith.constant 0 : i32
    %63 = vector.broadcast %c0_i32_28 : i32 to vector<16x1xi32>
    %64 = arith.cmpi slt, %60, %63 : vector<16x1xi32>
    %c0_i32_29 = arith.constant 0 : i32
    %65 = arith.cmpi slt, %58, %c0_i32_29 : i32
    %66 = vector.broadcast %65 : i1 to vector<16x1xi1>
    %67 = vector.broadcast %66 : vector<16x1xi1> to vector<16x1xi1>
    %68 = arith.xori %64, %67 : vector<16x1xi1>
    %69 = arith.andi %68, %62 : vector<16x1xi1>
    %70 = vector.broadcast %58 : i32 to vector<16x1xi32>
    %71 = arith.addi %60, %70 : vector<16x1xi32>
    %72 = arith.select %69, %71, %60 : vector<16x1xi1>, vector<16x1xi32>
    %c0_i32_30 = arith.constant 0 : i32
    %73 = vector.broadcast %c0_i32_30 : i32 to vector<16x1xi32>
    %74 = arith.cmpi sgt, %72, %73 : vector<16x1xi32>
    %75 = arith.extui %74 : vector<16x1xi1> to vector<16x1xi32>
    %76 = arith.sitofp %75 : vector<16x1xi32> to vector<16x1xf32>
    %c7_i32 = arith.constant 7 : i32
    %77 = vector.broadcast %c7_i32 : i32 to vector<16x1xi32>
    %78 = arith.cmpi slt, %72, %77 : vector<16x1xi32>
    %79 = arith.extui %78 : vector<16x1xi1> to vector<16x1xi32>
    %80 = arith.sitofp %79 : vector<16x1xi32> to vector<16x1xf32>
    %c1_i32_31 = arith.constant 1 : i32
    %81 = tpu.dynamic_rotate %55 by %c1_i32_31 dim 0 : vector<16x64xf32>, i32 -> vector<16x64xf32>
    %82 = vector.broadcast %76 : vector<16x1xf32> to vector<16x64xf32>
    %83 = arith.mulf %81, %82 : vector<16x64xf32>
    %c15_i32_32 = arith.constant 15 : i32
    %84 = tpu.dynamic_rotate %55 by %c15_i32_32 dim 0 : vector<16x64xf32>, i32 -> vector<16x64xf32>
    %85 = vector.broadcast %80 : vector<16x1xf32> to vector<16x64xf32>
    %86 = arith.mulf %84, %85 : vector<16x64xf32>
    %c0_33 = arith.constant 0 : index
    %c0_34 = arith.constant 0 : index
    %c0_35 = arith.constant 0 : index
    %87 = vector.load %arg6[%c0_33, %c0_34, %c0_35] : memref<3x64x256xf32, #tpu.memory_space<vmem>>, vector<1x64x256xf32>
    %88 = vector.shape_cast %87 : vector<1x64x256xf32> to vector<64x256xf32>
    %cst_36 = arith.constant dense<0.000000e+00> : vector<16x256xf32>
    %89 = tpu.matmul %83, %88, %cst_36 {dimension_numbers = #tpu.dot_dimension_numbers<[1], [0], [0], [1], [0, 0, 1, 1], [], []>} : vector<16x64xf32>, vector<64x256xf32>, vector<16x256xf32> -> vector<16x256xf32>
    %c1_37 = arith.constant 1 : index
    %c0_38 = arith.constant 0 : index
    %c0_39 = arith.constant 0 : index
    %90 = vector.load %arg6[%c1_37, %c0_38, %c0_39] : memref<3x64x256xf32, #tpu.memory_space<vmem>>, vector<1x64x256xf32>
    %91 = vector.shape_cast %90 : vector<1x64x256xf32> to vector<64x256xf32>
    %cst_40 = arith.constant dense<0.000000e+00> : vector<16x256xf32>
    %92 = tpu.matmul %55, %91, %cst_40 {dimension_numbers = #tpu.dot_dimension_numbers<[1], [0], [0], [1], [0, 0, 1, 1], [], []>} : vector<16x64xf32>, vector<64x256xf32>, vector<16x256xf32> -> vector<16x256xf32>
    %93 = arith.addf %89, %92 : vector<16x256xf32>
    %c2_41 = arith.constant 2 : index
    %c0_42 = arith.constant 0 : index
    %c0_43 = arith.constant 0 : index
    %94 = vector.load %arg6[%c2_41, %c0_42, %c0_43] : memref<3x64x256xf32, #tpu.memory_space<vmem>>, vector<1x64x256xf32>
    %95 = vector.shape_cast %94 : vector<1x64x256xf32> to vector<64x256xf32>
    %cst_44 = arith.constant dense<0.000000e+00> : vector<16x256xf32>
    %96 = tpu.matmul %86, %95, %cst_44 {dimension_numbers = #tpu.dot_dimension_numbers<[1], [0], [0], [1], [0, 0, 1, 1], [], []>} : vector<16x64xf32>, vector<64x256xf32>, vector<16x256xf32> -> vector<16x256xf32>
    %97 = arith.addf %93, %96 : vector<16x256xf32>
    %c0_45 = arith.constant 0 : index
    %c0_46 = arith.constant 0 : index
    %98 = vector.load %arg7[%c0_45, %c0_46] : memref<1x256xf32, #tpu.memory_space<vmem>>, vector<1x256xf32>
    %99 = vector.broadcast %98 : vector<1x256xf32> to vector<16x256xf32>
    %100 = arith.addf %97, %99 : vector<16x256xf32>
    %cst_47 = arith.constant 0.000000e+00 : f32
    %101 = vector.broadcast %cst_47 : f32 to vector<16x256xf32>
    %102 = arith.maximumf %100, %101 : vector<16x256xf32>
    %c15_i32_48 = arith.constant 15 : i32
    %103 = tpu.dynamic_rotate %102 by %c15_i32_48 dim 0 : vector<16x256xf32>, i32 -> vector<16x256xf32>
    %104 = arith.maximumf %102, %103 : vector<16x256xf32>
    %c224_i32 = arith.constant 224 : i32
    %105 = tpu.dynamic_rotate %104 by %c224_i32 dim 1 : vector<16x256xf32>, i32 -> vector<16x256xf32>
    %106 = arith.maximumf %104, %105 : vector<16x256xf32>
    %c0_49 = arith.constant 0 : index
    %c0_50 = arith.constant 0 : index
    %107 = vector.load %arg9[%c0_49, %c0_50] : memref<2x16xf32, #tpu.memory_space<vmem>>, vector<2x16xf32>
    %c0_51 = arith.constant 0 : index
    %c0_52 = arith.constant 0 : index
    %108 = vector.load %arg8[%c0_51, %c0_52] : memref<256x128xf32, #tpu.memory_space<vmem>>, vector<256x128xf32>
    %cst_53 = arith.constant dense<0.000000e+00> : vector<16x128xf32>
    %109 = tpu.matmul %106, %108, %cst_53 {dimension_numbers = #tpu.dot_dimension_numbers<[1], [0], [0], [1], [0, 0, 1, 1], [], []>} : vector<16x256xf32>, vector<256x128xf32>, vector<16x128xf32> -> vector<16x128xf32>
    %cst_54 = arith.constant dense<0.000000e+00> : vector<2x128xf32>
    %110 = tpu.matmul %107, %109, %cst_54 {dimension_numbers = #tpu.dot_dimension_numbers<[1], [0], [0], [1], [0, 0, 1, 1], [], []>} : vector<2x16xf32>, vector<16x128xf32>, vector<2x128xf32> -> vector<2x128xf32>
    %c0_55 = arith.constant 0 : index
    %c0_56 = arith.constant 0 : index
    %111 = vector.load %arg10[%c0_55, %c0_56] : memref<128x128xf32, #tpu.memory_space<vmem>>, vector<128x128xf32>
    %cst_57 = arith.constant dense<0.000000e+00> : vector<2x128xf32>
    %112 = tpu.matmul %110, %111, %cst_57 {dimension_numbers = #tpu.dot_dimension_numbers<[1], [0], [0], [1], [0, 0, 1, 1], [], []>} : vector<2x128xf32>, vector<128x128xf32>, vector<2x128xf32> -> vector<2x128xf32>
    %c0_58 = arith.constant 0 : index
    %c0_59 = arith.constant 0 : index
    %113 = vector.load %arg11[%c0_58, %c0_59] : memref<1x128xf32, #tpu.memory_space<vmem>>, vector<1x128xf32>
    %114 = vector.broadcast %113 : vector<1x128xf32> to vector<2x128xf32>
    %115 = arith.addf %112, %114 : vector<2x128xf32>
    %c0_60 = arith.constant 0 : index
    %c0_61 = arith.constant 0 : index
    %116 = vector.load %arg12[%c0_60, %c0_61] : memref<2x128xf32, #tpu.memory_space<vmem>>, vector<2x128xf32>
    tpu.vector_store %arg12[%c0_60, %c0_61], %115 {strides = array<i32>} : memref<2x128xf32, #tpu.memory_space<vmem>>, vector<2x128xf32>,
    return
  }
  func.func @transform_0(%arg0: i32) -> (i32, i32) {
    %c0_i32 = arith.constant 0 : i32
    %c0_i32_0 = arith.constant 0 : i32
    return %arg0, %c0_i32 : i32, i32
  }
  func.func @transform_1(%arg0: i32) -> (i32, i32, i32) {
    %c0_i32 = arith.constant 0 : i32
    %c0_i32_0 = arith.constant 0 : i32
    %c0_i32_1 = arith.constant 0 : i32
    %c0_i32_2 = arith.constant 0 : i32
    return %c0_i32, %c0_i32_0, %c0_i32_1 : i32, i32, i32
  }
  func.func @transform_2(%arg0: i32) -> (i32, i32) {
    %c0_i32 = arith.constant 0 : i32
    %c0_i32_0 = arith.constant 0 : i32
    %c0_i32_1 = arith.constant 0 : i32
    return %c0_i32, %c0_i32_0 : i32, i32
  }
  func.func @transform_3(%arg0: i32) -> (i32, i32) {
    %c0_i32 = arith.constant 0 : i32
    %c0_i32_0 = arith.constant 0 : i32
    %c0_i32_1 = arith.constant 0 : i32
    return %c0_i32, %c0_i32_0 : i32, i32
  }
  func.func @transform_4(%arg0: i32) -> (i32, i32) {
    %c0_i32 = arith.constant 0 : i32
    %c0_i32_0 = arith.constant 0 : i32
    %c0_i32_1 = arith.constant 0 : i32
    return %c0_i32, %c0_i32_0 : i32, i32
  }
  func.func @transform_5(%arg0: i32) -> (i32, i32, i32) {
    %c0_i32 = arith.constant 0 : i32
    %c0_i32_0 = arith.constant 0 : i32
    %c0_i32_1 = arith.constant 0 : i32
    %c0_i32_2 = arith.constant 0 : i32
    return %c0_i32, %c0_i32_0, %c0_i32_1 : i32, i32, i32
  }
  func.func @transform_6(%arg0: i32) -> (i32, i32) {
    %c0_i32 = arith.constant 0 : i32
    %c0_i32_0 = arith.constant 0 : i32
    %c0_i32_1 = arith.constant 0 : i32
    return %c0_i32, %c0_i32_0 : i32, i32
  }
  func.func @transform_7(%arg0: i32) -> (i32, i32) {
    %c0_i32 = arith.constant 0 : i32
    %c0_i32_0 = arith.constant 0 : i32
    %c0_i32_1 = arith.constant 0 : i32
    return %c0_i32, %c0_i32_0 : i32, i32
  }
  func.func @transform_8(%arg0: i32) -> (i32, i32) {
    %c0_i32 = arith.constant 0 : i32
    %c0_i32_0 = arith.constant 0 : i32
    %c0_i32_1 = arith.constant 0 : i32
    return %c0_i32, %c0_i32_0 : i32, i32
  }
  func.func @transform_9(%arg0: i32) -> (i32, i32) {
    %c0_i32 = arith.constant 0 : i32
    %c0_i32_0 = arith.constant 0 : i32
    %c0_i32_1 = arith.constant 0 : i32
    return %c0_i32, %c0_i32_0 : i32, i32
  }
  func.func @transform_10(%arg0: i32) -> (i32, i32) {
    %c0_i32 = arith.constant 0 : i32
    %c0_i32_0 = arith.constant 0 : i32
    %c0_i32_1 = arith.constant 0 : i32
    return %c0_i32, %c0_i32_0 : i32, i32
  }
  func.func @transform_11(%arg0: i32) -> (i32, i32) {
    %c0_i32 = arith.constant 0 : i32
    %c0_i32_0 = arith.constant 0 : i32
    return %arg0, %c0_i32 : i32, i32
  }
}

</mosaic_0001>

<llo_original>
// kernel: tile.13
$region0: #{tile.13}
  #allocation0 [shape = 's32[1]{0}', space=sflag, size = 0x4, scoped, tag = 'scoped memory for tile.13']
  %s0 = inlined_call_operand.vmem [shape: f32[8], index: 0, kind: input, shape index: {}]
  %s1 = inlined_call_operand.vmem [shape: f32[16,8], index: 1, kind: output, shape index: {}]
  // Predicated region
  $region2: #{tile.13} parent=0 // pred_check
    _
  $region3: #{tile.13} parent=0 // pred_check_branch
    %3 = sbr.rel (0) target = $region5
  $region4: #{tile.13} parent=0 // pred_region
    _
  $region5: #{tile.13} parent=0 // pred_fallthru
    _
  %v4 = vld [vmem:[%s0] ss:$0 sm:$0xff]
  %5 = vst [vmem:[%s1] sm:$0xff] %v4
  %s6 = scalar_lea.vmem %s1, 8
  %7 = vst [vmem:[%s6] sm:$0xff] %v4

// kernel: tile.14
$region0: #{tile.14}
  %s0 = inlined_call_operand.vmem [shape: f32[16,8], index: 0, kind: input, shape index: {}]
  %s1 = inlined_call_operand.vmem [shape: f32[1,128], index: 1, kind: output, shape index: {}]
  $region1: #{tile.14} parent=0
    #allocation0 [shape = 'u8[4096]{0}', space=vmem, size = 0x1000, scoped, tag = 'scoped mem for output reshape']
    %v2 = vld [vmem:[%s0] sm:$0x1]
    %vm3 = vcmask 64512
    %4 = vst.msk [vmem:[#allocation0] sm:$0x1] %vm3, %v2
    %s5 = scalar_lea.vmem %s0, 15
    %v6 = vld [vmem:[%s5] sm:$0x1]
    %7 = vrot.lane.b32.xlu0 %v6, 120
    %v8 = vpop.permute.xlu0 %7
    %vm9 = vcmask 1048512
    %10 = vst.msk [vmem:[#allocation0] sm:$0x1] %vm9, %v8
    %s11 = scalar_lea.vmem %s0, 14
    %v12 = vld [vmem:[%s11] sm:$0x1]
    %13 = vrot.lane.b32.xlu0 %v12, 112
    %v14 = vpop.permute.xlu0 %13
    %vm15 = vcmask 982912
    %16 = vst.msk [vmem:[#allocation0] sm:$0x1] %vm15, %v14
    %s17 = scalar_lea.vmem %s0, 13
    %v18 = vld [vmem:[%s17] sm:$0x1]
    %19 = vrot.lane.b32.xlu0 %v18, 104
    %v20 = vpop.permute.xlu0 %19
    %vm21 = vcmask 917312
    %22 = vst.msk [vmem:[#allocation0] sm:$0x1] %vm21, %v20
    %s23 = scalar_lea.vmem %s0, 12
    %v24 = vld [vmem:[%s23] sm:$0x1]
    %25 = vrot.lane.b32.xlu0 %v24, 96
    %v26 = vpop.permute.xlu0 %25
    %vm27 = vcmask 851712
    %28 = vst.msk [vmem:[#allocation0] sm:$0x1] %vm27, %v26
    %s29 = scalar_lea.vmem %s0, 11
    %v30 = vld [vmem:[%s29] sm:$0x1]
    %31 = vrot.lane.b32.xlu0 %v30, 88
    %v32 = vpop.permute.xlu0 %31
    %vm33 = vcmask 786112
    %34 = vst.msk [vmem:[#allocation0] sm:$0x1] %vm33, %v32
    %s35 = scalar_lea.vmem %s0, 10
    %v36 = vld [vmem:[%s35] sm:$0x1]
    %37 = vrot.lane.b32.xlu0 %v36, 80
    %v38 = vpop.permute.xlu0 %37
    %vm39 = vcmask 720512
    %40 = vst.msk [vmem:[#allocation0] sm:$0x1] %vm39, %v38
    %s41 = scalar_lea.vmem %s0, 9
    %v42 = vld [vmem:[%s41] sm:$0x1]
    %43 = vrot.lane.b32.xlu0 %v42, 72
    %v44 = vpop.permute.xlu0 %43
    %vm45 = vcmask 654912
    %46 = vst.msk [vmem:[#allocation0] sm:$0x1] %vm45, %v44
    %s47 = scalar_lea.vmem %s0, 8
    %v48 = vld [vmem:[%s47] sm:$0x1]
    %49 = vrot.lane.b32.xlu0 %v48, 64
    %v50 = vpop.permute.xlu0 %49
    %vm51 = vcmask 589312
    %52 = vst.msk [vmem:[#allocation0] sm:$0x1] %vm51, %v50
    %s53 = scalar_lea.vmem %s0, 7
    %v54 = vld [vmem:[%s53] sm:$0x1]
    %55 = vrot.lane.b32.xlu0 %v54, 56
    %v56 = vpop.permute.xlu0 %55
    %vm57 = vcmask 523712
    %58 = vst.msk [vmem:[#allocation0] sm:$0x1] %vm57, %v56
    %s59 = scalar_lea.vmem %s0, 6
    %v60 = vld [vmem:[%s59] sm:$0x1]
    %61 = vrot.lane.b32.xlu0 %v60, 48
    %v62 = vpop.permute.xlu0 %61
    %vm63 = vcmask 458112
    %64 = vst.msk [vmem:[#allocation0] sm:$0x1] %vm63, %v62
    %s65 = scalar_lea.vmem %s0, 5
    %v66 = vld [vmem:[%s65] sm:$0x1]
    %67 = vrot.lane.b32.xlu0 %v66, 40
    %v68 = vpop.permute.xlu0 %67
    %vm69 = vcmask 392512
    %70 = vst.msk [vmem:[#allocation0] sm:$0x1] %vm69, %v68
    %s71 = scalar_lea.vmem %s0, 4
    %v72 = vld [vmem:[%s71] sm:$0x1]
    %73 = vrot.lane.b32.xlu0 %v72, 32
    %v74 = vpop.permute.xlu0 %73
    %vm75 = vcmask 326912
    %76 = vst.msk [vmem:[#allocation0] sm:$0x1] %vm75, %v74
    %s77 = scalar_lea.vmem %s0, 3
    %v78 = vld [vmem:[%s77] sm:$0x1]
    %79 = vrot.lane.b32.xlu0 %v78, 24
    %v80 = vpop.permute.xlu0 %79
    %vm81 = vcmask 261312
    %82 = vst.msk [vmem:[#allocation0] sm:$0x1] %vm81, %v80
    %s83 = scalar_lea.vmem %s0, 2
    %v84 = vld [vmem:[%s83] sm:$0x1]
    %85 = vrot.lane.b32.xlu0 %v84, 16
    %v86 = vpop.permute.xlu0 %85
    %vm87 = vcmask 195712
    %88 = vst.msk [vmem:[#allocation0] sm:$0x1] %vm87, %v86
    %s89 = scalar_lea.vmem %s0, 1
    %v90 = vld [vmem:[%s89] sm:$0x1]
    %91 = vrot.lane.b32.xlu0 %v90, 8
    %v92 = vpop.permute.xlu0 %91
    %vm93 = vcmask 130112
    %94 = vst.msk [vmem:[#allocation0] sm:$0x1] %vm93, %v92
    %s96 = sshllo.u32 0, 1
    %v98 = vld [vmem:[#allocation0] sm:%s96]
    %s99 = sshllo.u32 0, 1
    %100 = vst [vmem:[%s1] sm:%s99] %v98

// kernel: tile.18
$region0: #{tile.18}
  #allocation0 [shape = 's32[1]{0}', space=sflag, size = 0x4, scoped, tag = 'scoped memory for tile.18']
  %s0 = inlined_call_operand.vmem [shape: f32[32], index: 0, kind: input, shape index: {}]
  %s1 = inlined_call_operand.vmem [shape: f32[8,32], index: 1, kind: output, shape index: {}]
  // Predicated region
  $region2: #{tile.18} parent=0 // pred_check
    _
  $region3: #{tile.18} parent=0 // pred_check_branch
    %3 = sbr.rel (0) target = $region5
  $region4: #{tile.18} parent=0 // pred_region
    _
  $region5: #{tile.18} parent=0 // pred_fallthru
    _
  %v4 = vld [vmem:[%s0] ss:$0 sm:$0xff]
  %5 = vst [vmem:[%s1] sm:$0xff] %v4

// kernel: tile.19
$region0: #{tile.19}
  %s0 = inlined_call_operand.vmem [shape: f32[8,32], index: 0, kind: input, shape index: {}]
  %s1 = inlined_call_operand.vmem [shape: f32[1,256], index: 1, kind: output, shape index: {}]
  $region1: #{tile.19} parent=0
    #allocation0 [shape = 'u8[8192]{0}', space=vmem, size = 0x2000, scoped, tag = 'scoped mem for output reshape']
    %s2 = smov 3
    %v3 = vld [vmem:[%s0] ss:$4 sm:%s2]
    %vm4 = vcmask 261120
    %5 = vst.msk [vmem:[#allocation0] ss:$8 sm:$0x3] %vm4, %v3
    %s6 = scalar_lea.vmem %s0, 3
    %s7 = smov 3
    %v8 = vld [vmem:[%s6] ss:$4 sm:%s7]
    %9 = vrot.lane.b32.xlu0 %v8, 96
    %v10 = vpop.permute.xlu0 %9
    %vm11 = vcmask 1048320
    %12 = vst.msk [vmem:[#allocation0] ss:$8 sm:$0x3] %vm11, %v10
    %s13 = scalar_lea.vmem %s0, 2
    %s14 = smov 3
    %v15 = vld [vmem:[%s13] ss:$4 sm:%s14]
    %16 = vrot.lane.b32.xlu0 %v15, 64
    %v17 = vpop.permute.xlu0 %16
    %vm18 = vcmask 785920
    %19 = vst.msk [vmem:[#allocation0] ss:$8 sm:$0x3] %vm18, %v17
    %s20 = scalar_lea.vmem %s0, 1
    %s21 = smov 3
    %v22 = vld [vmem:[%s20] ss:$4 sm:%s21]
    %23 = vrot.lane.b32.xlu0 %v22, 32
    %v24 = vpop.permute.xlu0 %23
    %vm25 = vcmask 523520
    %26 = vst.msk [vmem:[#allocation0] ss:$8 sm:$0x3] %vm25, %v24
    %s28 = sshllo.u32 0, 1
    %v30 = vld [vmem:[#allocation0] sm:%s28]
    %s31 = sshllo.u32 0, 1
    %32 = vst [vmem:[%s1] sm:%s31] %v30
    %s33 = scalar_lea.vmem [#allocation0], 8
    %v34 = vld [vmem:[%s33] sm:%s28]
    %s35 = sshllo.u32 0, 1
    %s36 = scalar_lea.vmem %s1, 1
    %37 = vst [vmem:[%s36] sm:%s35] %v34

// kernel: cnn_forward.1
$region0: #{cnn_forward.1}
  #allocation0 [shape = 'u32[]', space=smem, size = 0x4, offset = 0x4, fixed_abs, tag = 'smem constant byte address 0x4 - core index']
  #allocation1 [shape = 'u32[144,128]{1,0:T(1,128)}', space=vmem, size = 0x12000, scoped, tag = 'internal scratch']
  %s0 = inlined_call_operand.vmem [shape: f32[32,64], index: 0, kind: input, shape index: {}]
  %s1 = inlined_call_operand.vmem [shape: f32[3,64,128], index: 1, kind: input, shape index: {}]
  %s2 = inlined_call_operand.vmem [shape: f32[1,128], index: 2, kind: input, shape index: {}]
  %s3 = inlined_call_operand.vmem [shape: f32[128,64], index: 3, kind: input, shape index: {}]
  %s4 = inlined_call_operand.vmem [shape: f32[16,32], index: 4, kind: input, shape index: {}]
  %s5 = inlined_call_operand.vmem [shape: f32[3,64,256], index: 5, kind: input, shape index: {}]
  %s6 = inlined_call_operand.vmem [shape: f32[1,256], index: 6, kind: input, shape index: {}]
  %s7 = inlined_call_operand.vmem [shape: f32[256,128], index: 7, kind: input, shape index: {}]
  %s8 = inlined_call_operand.vmem [shape: f32[2,16], index: 8, kind: input, shape index: {}]
  %s9 = inlined_call_operand.vmem [shape: f32[128,128], index: 9, kind: input, shape index: {}]
  %s10 = inlined_call_operand.vmem [shape: f32[1,128], index: 10, kind: input, shape index: {}]
  %s11 = inlined_call_operand.hbm [shape: f32[2,128], index: 11, kind: output, shape index: {}]
  %s12 = sld [smem:[#allocation0]]
  $region54: #{cnn_forward.1} parent=0
    _
  %s14 = ssub.s32 1, %s12
  %s15 = scalar_select 0, %s14, %s12
  $region1: #{cnn_forward.1} parent=0
    #allocation2 [shape = 'u8[1024]{0}', space=vmem, size = 0x400, scoped, tag = 'output window, operand 0, single buffered']
    #allocation3 [shape = 's32[1]{0}', space=sflag, size = 0x4, scoped, tag = 'scoped memory for cnn_forward.1']
    %16 = vsyncpa [#allocation3], 0
    // Predicated region
    $region2: #{cnn_forward.1} parent=1 // pred_check
      _
    $region3: #{cnn_forward.1} parent=1 // pred_check_branch
      %18 = sbr.rel (0) target = $region5
    $region4: #{cnn_forward.1} parent=1 // pred_region
      _
    $region5: #{cnn_forward.1} parent=1 // pred_fallthru
      _
    // Predicated region
    $region6: #{cnn_forward.1} parent=1 // pred_check
      _
    $region7: #{cnn_forward.1} parent=1 // pred_check_branch
      %20 = sbr.rel (0) target = $region9
    $region8: #{cnn_forward.1} parent=1 // pred_region
      _
    $region9: #{cnn_forward.1} parent=1 // pred_fallthru
      _
    // Predicated region
    $region10: #{cnn_forward.1} parent=1 // pred_check
      _
    $region11: #{cnn_forward.1} parent=1 // pred_check_branch
      %22 = sbr.rel (0) target = $region13
    $region12: #{cnn_forward.1} parent=1 // pred_region
      _
    $region13: #{cnn_forward.1} parent=1 // pred_fallthru
      _
    // Predicated region
    $region14: #{cnn_forward.1} parent=1 // pred_check
      _
    $region15: #{cnn_forward.1} parent=1 // pred_check_branch
      %24 = sbr.rel (0) target = $region17
    $region16: #{cnn_forward.1} parent=1 // pred_region
      _
    $region17: #{cnn_forward.1} parent=1 // pred_fallthru
      _
    // Predicated region
    $region18: #{cnn_forward.1} parent=1 // pred_check
      _
    $region19: #{cnn_forward.1} parent=1 // pred_check_branch
      %26 = sbr.rel (0) target = $region21
    $region20: #{cnn_forward.1} parent=1 // pred_region
      _
    $region21: #{cnn_forward.1} parent=1 // pred_fallthru
      _
    // Predicated region
    $region22: #{cnn_forward.1} parent=1 // pred_check
      _
    $region23: #{cnn_forward.1} parent=1 // pred_check_branch
      %28 = sbr.rel (0) target = $region25
    $region24: #{cnn_forward.1} parent=1 // pred_region
      _
    $region25: #{cnn_forward.1} parent=1 // pred_fallthru
      _
    // Predicated region
    $region26: #{cnn_forward.1} parent=1 // pred_check
      _
    $region27: #{cnn_forward.1} parent=1 // pred_check_branch
      %30 = sbr.rel (0) target = $region29
    $region28: #{cnn_forward.1} parent=1 // pred_region
      _
    $region29: #{cnn_forward.1} parent=1 // pred_fallthru
      _
    // Predicated region
    $region30: #{cnn_forward.1} parent=1 // pred_check
      _
    $region31: #{cnn_forward.1} parent=1 // pred_check_branch
      %32 = sbr.rel (0) target = $region33
    $region32: #{cnn_forward.1} parent=1 // pred_region
      _
    $region33: #{cnn_forward.1} parent=1 // pred_fallthru
      _
    // Predicated region
    $region34: #{cnn_forward.1} parent=1 // pred_check
      _
    $region35: #{cnn_forward.1} parent=1 // pred_check_branch
      %34 = sbr.rel (0) target = $region37
    $region36: #{cnn_forward.1} parent=1 // pred_region
      _
    $region37: #{cnn_forward.1} parent=1 // pred_fallthru
      _
    // Predicated region
    $region38: #{cnn_forward.1} parent=1 // pred_check
      _
    $region39: #{cnn_forward.1} parent=1 // pred_check_branch
      %36 = sbr.rel (0) target = $region41
    $region40: #{cnn_forward.1} parent=1 // pred_region
      _
    $region41: #{cnn_forward.1} parent=1 // pred_fallthru
      _
    // Predicated region
    $region42: #{cnn_forward.1} parent=1 // pred_check
      _
    $region43: #{cnn_forward.1} parent=1 // pred_check_branch
      %38 = sbr.rel (0) target = $region45
    $region44: #{cnn_forward.1} parent=1 // pred_region
      _
    $region45: #{cnn_forward.1} parent=1 // pred_fallthru
      _
    %v39 = vld [vmem:[%s0] sm:$0xff]
    %v40 = vld [vmem:[%s0 + $0x8] sm:$0xff]
    %v41 = vld [vmem:[%s0 + $0x10] sm:$0xff]
    %v42 = vld [vmem:[%s0 + $0x18] sm:$0xff]
    %v43 = vlaneseq
    %v44 = vshrl.u32 %v43, 7
    %v45 = vadd.s32 %v44, 8
    %v46 = vadd.s32 %v44, 16
    %v47 = vadd.s32 %v44, 24
    %vm48 = vcmp.lt.s32.totalorder %v44, 0
    %v49 = vsub.s32 0, %v44
    %v50 = vsel %vm48, %v49, %v44
    %v51 = vshrl.u32 %v50, 4
    %v52 = vand.u32 %v50, 15
    %v53 = vsub.s32 0, %v52
    %v54 = vsel %vm48, %v53, %v52
    %vm55 = vcmp.lt.s32.totalorder %v45, 0
    %v56 = vsub.s32 0, %v45
    %v57 = vsel %vm55, %v56, %v45
    %v58 = vshrl.u32 %v57, 4
    %v59 = vand.u32 %v57, 15
    %v60 = vsub.s32 0, %v59
    %v61 = vsel %vm55, %v60, %v59
    %vm62 = vcmp.lt.s32.totalorder %v46, 0
    %v63 = vsub.s32 0, %v46
    %v64 = vsel %vm62, %v63, %v46
    %v65 = vshrl.u32 %v64, 4
    %v66 = vand.u32 %v64, 15
    %v67 = vsub.s32 0, %v66
    %v68 = vsel %vm62, %v67, %v66
    %vm69 = vcmp.lt.s32.totalorder %v47, 0
    %v70 = vsub.s32 0, %v47
    %v71 = vsel %vm69, %v70, %v47
    %v72 = vshrl.u32 %v71, 4
    %v73 = vand.u32 %v71, 15
    %v74 = vsub.s32 0, %v73
    %v75 = vsel %vm69, %v74, %v73
    %vm76 = vcmp.ne.s32.totalorder %v54, 0
    %vm77 = vcmp.ne.s32.totalorder %v61, 0
    %vm78 = vcmp.ne.s32.totalorder %v68, 0
    %vm79 = vcmp.ne.s32.totalorder %v75, 0
    %vm80 = vcmp.lt.s32.totalorder %v54, 0
    %vm81 = vcmp.lt.s32.totalorder %v61, 0
    %vm82 = vcmp.lt.s32.totalorder %v68, 0
    %vm83 = vcmp.lt.s32.totalorder %v75, 0
    %vm84 = vmand %vm80, %vm76
    %vm85 = vmand %vm81, %vm77
    %vm86 = vmand %vm82, %vm78
    %vm87 = vmand %vm83, %vm79
    %v88 = vadd.s32 %v54, 16
    %v89 = vadd.s32 %v61, 16
    %v90 = vadd.s32 %v68, 16
    %v91 = vadd.s32 %v75, 16
    %v92 = vsel %vm84, %v88, %v54
    %v93 = vsel %vm85, %v89, %v61
    %v94 = vsel %vm86, %v90, %v68
    %v95 = vsel %vm87, %v91, %v75
    %vm96 = vcmp.gt.s32.totalorder %v92, 0
    %vm97 = vcmp.gt.s32.totalorder %v93, 0
    %vm98 = vcmp.gt.s32.totalorder %v94, 0
    %vm99 = vcmp.gt.s32.totalorder %v95, 0
    %v100 = vsel %vm96, 1, 0
    %v101 = vsel %vm97, 1, 0
    %v102 = vsel %vm98, 1, 0
    %v103 = vsel %vm99, 1, 0
    %v104 = vcvt.s32.f32 %v100
    %v105 = vcvt.s32.f32 %v101
    %v106 = vcvt.s32.f32 %v102
    %v107 = vcvt.s32.f32 %v103
    %vm108 = vcmp.lt.s32.totalorder %v92, 15
    %vm109 = vcmp.lt.s32.totalorder %v93, 15
    %vm110 = vcmp.lt.s32.totalorder %v94, 15
    %vm111 = vcmp.lt.s32.totalorder %v95, 15
    %v112 = vsel %vm108, 1, 0
    %v113 = vsel %vm109, 1, 0
    %v114 = vsel %vm110, 1, 0
    %v115 = vsel %vm111, 1, 0
    %v116 = vcvt.s32.f32 %v112
    %v117 = vcvt.s32.f32 %v113
    %v118 = vcvt.s32.f32 %v114
    %v119 = vcvt.s32.f32 %v115
    %v120 = vrot.slane %v39, 7
    %v121 = vrot.slane %v40, 7
    %v122 = vrot.slane %v41, 7
    %v123 = vrot.slane %v42, 7
    %vm124 = vcmp.lt.s32.totalorder %v44, 1
    %v125 = vsel %vm124, %v122, %v123
    %v126 = vsel %vm124, %v121, %v122
    %v127 = vsel %vm124, %v120, %v121
    %v128 = vsel %vm124, %v123, %v120
    %v129 = vmul.f32 %v128, %v104
    %v130 = vmul.f32 %v127, %v105
    %v131 = vmul.f32 %v126, %v106
    %v132 = vmul.f32 %v125, %v107
    %v133 = vrot.slane %v39, 1
    %v134 = vrot.slane %v40, 1
    %v135 = vrot.slane %v41, 1
    %v136 = vrot.slane %v42, 1
    %vm137 = vcmp.lt.s32.totalorder %v44, 7
    %v138 = vsel %vm137, %v135, %v136
    %v139 = vsel %vm137, %v134, %v135
    %v140 = vsel %vm137, %v133, %v134
    %v141 = vsel %vm137, %v136, %v133
    %v142 = vmul.f32 %v140, %v116
    %v143 = vmul.f32 %v139, %v117
    %v144 = vmul.f32 %v138, %v118
    %v145 = vmul.f32 %v141, %v119
    %v146 = vld [vmem:[%s1] sm:$0xff]
    %v147 = vld [vmem:[%s1 + $0x8] sm:$0xff]
    %v148 = vld [vmem:[%s1 + $0x10] sm:$0xff]
    %v149 = vld [vmem:[%s1 + $0x18] sm:$0xff]
    %v150 = vld [vmem:[%s1 + $0x20] sm:$0xff]
    %v151 = vld [vmem:[%s1 + $0x28] sm:$0xff]
    %v152 = vld [vmem:[%s1 + $0x30] sm:$0xff]
    %v153 = vld [vmem:[%s1 + $0x38] sm:$0xff]
    %s154 = scalar_lea.vmem %s1, 64
    %v155 = vld [vmem:[%s154] sm:$0xff]
    %v156 = vld [vmem:[%s154 + $0x8] sm:$0xff]
    %v157 = vld [vmem:[%s154 + $0x10] sm:$0xff]
    %v158 = vld [vmem:[%s154 + $0x18] sm:$0xff]
    %v159 = vld [vmem:[%s154 + $0x20] sm:$0xff]
    %v160 = vld [vmem:[%s154 + $0x28] sm:$0xff]
    %v161 = vld [vmem:[%s154 + $0x30] sm:$0xff]
    %v162 = vld [vmem:[%s154 + $0x38] sm:$0xff]
    %vm163 = vcmask 523264
    %v165 = vsel %vm163, %v39, 0
    %v168 = vsel %vm163, %v40, 0
    %v171 = vsel %vm163, %v41, 0
    %v174 = vsel %vm163, %v42, 0
    %176 = vmatprep.subr.mxu0 0.0
    %177 = vmatpush1.msra.mxu0 %v155
    %178 = vmatprep.subr.mxu0 0.0
    %179 = vmatpush1.msra.mxu0 %v156
    %180 = vmatprep.subr.mxu0 0.0
    %181 = vmatpush1.msra.mxu0 %v157
    %182 = vmatprep.subr.mxu0 0.0
    %183 = vmatpush1.msra.mxu0 %v158
    %184 = vmatprep.subr.mxu0 0.0
    %185 = vmatpush1.msra.mxu0 %v159
    %186 = vmatprep.subr.mxu0 0.0
    %187 = vmatpush1.msra.mxu0 %v160
    %188 = vmatprep.subr.mxu0 0.0
    %189 = vmatpush1.msra.mxu0 %v161
    %190 = vmatprep.subr.mxu0 0.0
    %191 = vmatpush1.msra.mxu0 %v162
    %192 = vmatprep.subr.mxu0 0.0
    %193 = vmatpush1.msra.mxu0 0.0
    %194 = vmatprep.subr.mxu0 0.0
    %195 = vmatpush1.msra.mxu0 0.0
    %196 = vmatprep.subr.mxu0 0.0
    %197 = vmatpush1.msra.mxu0 0.0
    %198 = vmatprep.subr.mxu0 0.0
    %199 = vmatpush1.msra.mxu0 0.0
    %200 = vmatprep.subr.mxu0 0.0
    %201 = vmatpush1.msra.mxu0 0.0
    %202 = vmatprep.subr.mxu0 0.0
    %203 = vmatpush1.msra.mxu0 0.0
    %204 = vmatprep.subr.mxu0 0.0
    %205 = vmatpush1.msra.mxu0 0.0
    %206 = vmatprep.subr.mxu0 0.0
    %207 = vmatpush1.msra.mxu0 0.0
    %208 = vmatprep.subr.mxu0 0.0
    %209 = vmatpush1.msra.mxu0 0.0
    %210 = vmatprep.subr.mxu0 0.0
    %211 = vmatpush1.msra.mxu0 0.0
    %212 = vmatprep.subr.mxu0 0.0
    %213 = vmatpush1.msra.mxu0 0.0
    %214 = vmatprep.subr.mxu0 0.0
    %215 = vmatpush1.msra.mxu0 0.0
    %216 = vmatprep.subr.mxu0 0.0
    %217 = vmatpush1.msra.mxu0 0.0
    %218 = vmatprep.subr.mxu0 0.0
    %219 = vmatpush1.msra.mxu0 0.0
    %220 = vmatprep.subr.mxu0 0.0
    %221 = vmatpush1.msra.mxu0 0.0
    %222 = vmatprep.subr.mxu0 0.0
    %223 = vmatpush1.msra.mxu0 0.0
    %224 = vmatprep.subr.mxu0 0.0
    %225 = vmatpush1.msra.mxu0 0.0
    %226 = vmatprep.subr.mxu0 0.0
    %227 = vmatpush1.msra.mxu0 0.0
    %228 = vmatprep.subr.mxu0 0.0
    %229 = vmatpush1.msra.mxu0 0.0
    %230 = vmatprep.subr.mxu0 0.0
    %231 = vmatpush1.msra.mxu0 0.0
    %232 = vmatprep.subr.mxu0 0.0
    %233 = vmatpush1.msra.mxu0 0.0
    %234 = vmatprep.subr.mxu0 0.0
    %235 = vmatpush1.msra.mxu0 0.0
    %236 = vmatprep.subr.mxu0 0.0
    %237 = vmatpush1.msra.mxu0 0.0
    %238 = vmatprep.subr.mxu0 0.0
    %239 = vmatpush1.msra.mxu0 0.0
    %240 = vmatprep.mubr.f32.mxu0 0.0
    %241 = vmatmul.mubr.f32.gmra.mrb[0].mxu0 %v165
    %v242 = vpop.f32.mrb[0].mxu0
    %v243 = vadd.f32 0.0, %v242
    %v244 = vpop.f32.mrb[0].mxu0
    %245 = vmatprep.mubr.f32.mxu0 0.0
    %246 = vmatmul.mubr.f32.gmra.mrb[0].mxu0 %v168
    %v247 = vpop.f32.mrb[0].mxu0
    %v248 = vadd.f32 0.0, %v247
    %v249 = vpop.f32.mrb[0].mxu0
    %250 = vmatprep.mubr.f32.mxu0 0.0
    %251 = vmatmul.mubr.f32.gmra.mrb[0].mxu0 %v171
    %v252 = vpop.f32.mrb[0].mxu0
    %v253 = vadd.f32 0.0, %v252
    %v254 = vpop.f32.mrb[0].mxu0
    %255 = vmatprep.mubr.f32.mxu0 0.0
    %256 = vmatmul.mubr.f32.gmra.mrb[0].mxu0 %v174
    %v257 = vpop.f32.mrb[0].mxu0
    %v258 = vadd.f32 0.0, %v257
    %v259 = vpop.f32.mrb[0].mxu0
    %260 = vdwg.mxu0
    %v262 = vsel %vm163, %v129, 0
    %v265 = vsel %vm163, %v130, 0
    %v268 = vsel %vm163, %v131, 0
    %v271 = vsel %vm163, %v132, 0
    %273 = vmatprep.subr.mxu0 0.0
    %274 = vmatpush1.msra.mxu0 %v146
    %275 = vmatprep.subr.mxu0 0.0
    %276 = vmatpush1.msra.mxu0 %v147
    %277 = vmatprep.subr.mxu0 0.0
    %278 = vmatpush1.msra.mxu0 %v148
    %279 = vmatprep.subr.mxu0 0.0
    %280 = vmatpush1.msra.mxu0 %v149
    %281 = vmatprep.subr.mxu0 0.0
    %282 = vmatpush1.msra.mxu0 %v150
    %283 = vmatprep.subr.mxu0 0.0
    %284 = vmatpush1.msra.mxu0 %v151
    %285 = vmatprep.subr.mxu0 0.0
    %286 = vmatpush1.msra.mxu0 %v152
    %287 = vmatprep.subr.mxu0 0.0
    %288 = vmatpush1.msra.mxu0 %v153
    %289 = vmatprep.subr.mxu0 0.0
    %290 = vmatpush1.msra.mxu0 0.0
    %291 = vmatprep.subr.mxu0 0.0
    %292 = vmatpush1.msra.mxu0 0.0
    %293 = vmatprep.subr.mxu0 0.0
    %294 = vmatpush1.msra.mxu0 0.0
    %295 = vmatprep.subr.mxu0 0.0
    %296 = vmatpush1.msra.mxu0 0.0
    %297 = vmatprep.subr.mxu0 0.0
    %298 = vmatpush1.msra.mxu0 0.0
    %299 = vmatprep.subr.mxu0 0.0
    %300 = vmatpush1.msra.mxu0 0.0
    %301 = vmatprep.subr.mxu0 0.0
    %302 = vmatpush1.msra.mxu0 0.0
    %303 = vmatprep.subr.mxu0 0.0
    %304 = vmatpush1.msra.mxu0 0.0
    %305 = vmatprep.subr.mxu0 0.0
    %306 = vmatpush1.msra.mxu0 0.0
    %307 = vmatprep.subr.mxu0 0.0
    %308 = vmatpush1.msra.mxu0 0.0
    %309 = vmatprep.subr.mxu0 0.0
    %310 = vmatpush1.msra.mxu0 0.0
    %311 = vmatprep.subr.mxu0 0.0
    %312 = vmatpush1.msra.mxu0 0.0
    %313 = vmatprep.subr.mxu0 0.0
    %314 = vmatpush1.msra.mxu0 0.0
    %315 = vmatprep.subr.mxu0 0.0
    %316 = vmatpush1.msra.mxu0 0.0
    %317 = vmatprep.subr.mxu0 0.0
    %318 = vmatpush1.msra.mxu0 0.0
    %319 = vmatprep.subr.mxu0 0.0
    %320 = vmatpush1.msra.mxu0 0.0
    %321 = vmatprep.subr.mxu0 0.0
    %322 = vmatpush1.msra.mxu0 0.0
    %323 = vmatprep.subr.mxu0 0.0
    %324 = vmatpush1.msra.mxu0 0.0
    %325 = vmatprep.subr.mxu0 0.0
    %326 = vmatpush1.msra.mxu0 0.0
    %327 = vmatprep.subr.mxu0 0.0
    %328 = vmatpush1.msra.mxu0 0.0
    %329 = vmatprep.subr.mxu0 0.0
    %330 = vmatpush1.msra.mxu0 0.0
    %331 = vmatprep.subr.mxu0 0.0
    %332 = vmatpush1.msra.mxu0 0.0
    %333 = vmatprep.subr.mxu0 0.0
    %334 = vmatpush1.msra.mxu0 0.0
    %335 = vmatprep.subr.mxu0 0.0
    %336 = vmatpush1.msra.mxu0 0.0
    %337 = vmatprep.mubr.f32.mxu0 0.0
    %338 = vmatmul.mubr.f32.gmra.mrb[0].mxu0 %v262
    %v339 = vpop.f32.mrb[0].mxu0
    %v340 = vadd.f32 %v243, %v339
    %v341 = vpop.f32.mrb[0].mxu0
    %342 = vmatprep.mubr.f32.mxu0 0.0
    %343 = vmatmul.mubr.f32.gmra.mrb[0].mxu0 %v265
    %v344 = vpop.f32.mrb[0].mxu0
    %v345 = vadd.f32 %v248, %v344
    %v346 = vpop.f32.mrb[0].mxu0
    %347 = vmatprep.mubr.f32.mxu0 0.0
    %348 = vmatmul.mubr.f32.gmra.mrb[0].mxu0 %v268
    %v349 = vpop.f32.mrb[0].mxu0
    %v350 = vadd.f32 %v253, %v349
    %v351 = vpop.f32.mrb[0].mxu0
    %352 = vmatprep.mubr.f32.mxu0 0.0
    %353 = vmatmul.mubr.f32.gmra.mrb[0].mxu0 %v271
    %v354 = vpop.f32.mrb[0].mxu0
    %v355 = vadd.f32 %v258, %v354
    %v356 = vpop.f32.mrb[0].mxu0
    %357 = vdwg.mxu0
    %s358 = scalar_lea.vmem %s1, 128
    %v359 = vld [vmem:[%s358] sm:$0xff]
    %v360 = vld [vmem:[%s358 + $0x8] sm:$0xff]
    %v361 = vld [vmem:[%s358 + $0x10] sm:$0xff]
    %v362 = vld [vmem:[%s358 + $0x18] sm:$0xff]
    %v363 = vld [vmem:[%s358 + $0x20] sm:$0xff]
    %v364 = vld [vmem:[%s358 + $0x28] sm:$0xff]
    %v365 = vld [vmem:[%s358 + $0x30] sm:$0xff]
    %v366 = vld [vmem:[%s358 + $0x38] sm:$0xff]
    %v368 = vsel %vm163, %v142, 0
    %v371 = vsel %vm163, %v143, 0
    %v374 = vsel %vm163, %v144, 0
    %v377 = vsel %vm163, %v145, 0
    %379 = vmatprep.subr.mxu0 0.0
    %380 = vmatpush1.msra.mxu0 %v359
    %381 = vmatprep.subr.mxu0 0.0
    %382 = vmatpush1.msra.mxu0 %v360
    %383 = vmatprep.subr.mxu0 0.0
    %384 = vmatpush1.msra.mxu0 %v361
    %385 = vmatprep.subr.mxu0 0.0
    %386 = vmatpush1.msra.mxu0 %v362
    %387 = vmatprep.subr.mxu0 0.0
    %388 = vmatpush1.msra.mxu0 %v363
    %389 = vmatprep.subr.mxu0 0.0
    %390 = vmatpush1.msra.mxu0 %v364
    %391 = vmatprep.subr.mxu0 0.0
    %392 = vmatpush1.msra.mxu0 %v365
    %393 = vmatprep.subr.mxu0 0.0
    %394 = vmatpush1.msra.mxu0 %v366
    %395 = vmatprep.subr.mxu0 0.0
    %396 = vmatpush1.msra.mxu0 0.0
    %397 = vmatprep.subr.mxu0 0.0
    %398 = vmatpush1.msra.mxu0 0.0
    %399 = vmatprep.subr.mxu0 0.0
    %400 = vmatpush1.msra.mxu0 0.0
    %401 = vmatprep.subr.mxu0 0.0
    %402 = vmatpush1.msra.mxu0 0.0
    %403 = vmatprep.subr.mxu0 0.0
    %404 = vmatpush1.msra.mxu0 0.0
    %405 = vmatprep.subr.mxu0 0.0
    %406 = vmatpush1.msra.mxu0 0.0
    %407 = vmatprep.subr.mxu0 0.0
    %408 = vmatpush1.msra.mxu0 0.0
    %409 = vmatprep.subr.mxu0 0.0
    %410 = vmatpush1.msra.mxu0 0.0
    %411 = vmatprep.subr.mxu0 0.0
    %412 = vmatpush1.msra.mxu0 0.0
    %413 = vmatprep.subr.mxu0 0.0
    %414 = vmatpush1.msra.mxu0 0.0
    %415 = vmatprep.subr.mxu0 0.0
    %416 = vmatpush1.msra.mxu0 0.0
    %417 = vmatprep.subr.mxu0 0.0
    %418 = vmatpush1.msra.mxu0 0.0
    %419 = vmatprep.subr.mxu0 0.0
    %420 = vmatpush1.msra.mxu0 0.0
    %421 = vmatprep.subr.mxu0 0.0
    %422 = vmatpush1.msra.mxu0 0.0
    %423 = vmatprep.subr.mxu0 0.0
    %424 = vmatpush1.msra.mxu0 0.0
    %425 = vmatprep.subr.mxu0 0.0
    %426 = vmatpush1.msra.mxu0 0.0
    %427 = vmatprep.subr.mxu0 0.0
    %428 = vmatpush1.msra.mxu0 0.0
    %429 = vmatprep.subr.mxu0 0.0
    %430 = vmatpush1.msra.mxu0 0.0
    %431 = vmatprep.subr.mxu0 0.0
    %432 = vmatpush1.msra.mxu0 0.0
    %433 = vmatprep.subr.mxu0 0.0
    %434 = vmatpush1.msra.mxu0 0.0
    %435 = vmatprep.subr.mxu0 0.0
    %436 = vmatpush1.msra.mxu0 0.0
    %437 = vmatprep.subr.mxu0 0.0
    %438 = vmatpush1.msra.mxu0 0.0
    %439 = vmatprep.subr.mxu0 0.0
    %440 = vmatpush1.msra.mxu0 0.0
    %441 = vmatprep.subr.mxu0 0.0
    %442 = vmatpush1.msra.mxu0 0.0
    %443 = vmatprep.mubr.f32.mxu0 0.0
    %444 = vmatmul.mubr.f32.gmra.mrb[0].mxu0 %v368
    %v445 = vpop.f32.mrb[0].mxu0
    %v446 = vadd.f32 0.0, %v445
    %v447 = vpop.f32.mrb[0].mxu0
    %448 = vmatprep.mubr.f32.mxu0 0.0
    %449 = vmatmul.mubr.f32.gmra.mrb[0].mxu0 %v371
    %v450 = vpop.f32.mrb[0].mxu0
    %v451 = vadd.f32 0.0, %v450
    %v452 = vpop.f32.mrb[0].mxu0
    %453 = vmatprep.mubr.f32.mxu0 0.0
    %454 = vmatmul.mubr.f32.gmra.mrb[0].mxu0 %v374
    %v455 = vpop.f32.mrb[0].mxu0
    %v456 = vadd.f32 0.0, %v455
    %v457 = vpop.f32.mrb[0].mxu0
    %458 = vmatprep.mubr.f32.mxu0 0.0
    %459 = vmatmul.mubr.f32.gmra.mrb[0].mxu0 %v377
    %v460 = vpop.f32.mrb[0].mxu0
    %v461 = vadd.f32 0.0, %v460
    %v462 = vpop.f32.mrb[0].mxu0
    %463 = vdwg.mxu0
    %v464 = vadd.f32 %v340, %v446
    %v465 = vadd.f32 %v345, %v451
    %v466 = vadd.f32 %v350, %v456
    %v467 = vadd.f32 %v355, %v461
    %v468 = vld [vmem:[%s2] sm:$0x1]
    %v470 = vlaneseq
    %v471 = vshrl.u32 %v470, 7
    %v472 = vsub.s32 0, %v471
    %v473 = vrot.slane %v468, %v472
    %v475 = vadd.f32 %v464, %v473
    %v476 = vadd.f32 %v465, %v473
    %v477 = vadd.f32 %v466, %v473
    %v478 = vadd.f32 %v467, %v473
    %v479 = vmax.f32 %v475, 0.0
    %v480 = vmax.f32 %v476, 0.0
    %v481 = vmax.f32 %v477, 0.0
    %v482 = vmax.f32 %v478, 0.0
    %v483 = vrot.slane %v479, 1
    %v484 = vrot.slane %v480, 1
    %v485 = vrot.slane %v481, 1
    %v486 = vrot.slane %v482, 1
    %v487 = vsel %vm137, %v485, %v486
    %v488 = vsel %vm137, %v484, %v485
    %v489 = vsel %vm137, %v483, %v484
    %v490 = vsel %vm137, %v486, %v483
    %v491 = vmax.f32 %v479, %v489
    %v492 = vmax.f32 %v480, %v488
    %v493 = vmax.f32 %v481, %v487
    %v494 = vmax.f32 %v482, %v490
    %495 = vrot.lane.b32.xlu0 %v491, 120
    %v496 = vpop.permute.xlu0 %495
    %497 = vrot.lane.b32.xlu0 %v492, 120
    %v498 = vpop.permute.xlu0 %497
    %499 = vrot.lane.b32.xlu0 %v493, 120
    %v500 = vpop.permute.xlu0 %499
    %501 = vrot.lane.b32.xlu0 %v494, 120
    %v502 = vpop.permute.xlu0 %501
    %v503 = vmax.f32 %v491, %v496
    %v504 = vmax.f32 %v492, %v498
    %v505 = vmax.f32 %v493, %v500
    %v506 = vmax.f32 %v494, %v502
    %v507 = vld [vmem:[%s4] sm:$0xff]
    %v508 = vld [vmem:[%s4 + $0x8] sm:$0xff]
    %v509 = vld [vmem:[%s3] sm:$0xff]
    %v510 = vld [vmem:[%s3 + $0x8] sm:$0xff]
    %v511 = vld [vmem:[%s3 + $0x10] sm:$0xff]
    %v512 = vld [vmem:[%s3 + $0x18] sm:$0xff]
    %v513 = vld [vmem:[%s3 + $0x20] sm:$0xff]
    %v514 = vld [vmem:[%s3 + $0x28] sm:$0xff]
    %v515 = vld [vmem:[%s3 + $0x30] sm:$0xff]
    %v516 = vld [vmem:[%s3 + $0x38] sm:$0xff]
    %v517 = vld [vmem:[%s3 + $0x40] sm:$0xff]
    %v518 = vld [vmem:[%s3 + $0x48] sm:$0xff]
    %v519 = vld [vmem:[%s3 + $0x50] sm:$0xff]
    %v520 = vld [vmem:[%s3 + $0x58] sm:$0xff]
    %v521 = vld [vmem:[%s3 + $0x60] sm:$0xff]
    %v522 = vld [vmem:[%s3 + $0x68] sm:$0xff]
    %v523 = vld [vmem:[%s3 + $0x70] sm:$0xff]
    %v524 = vld [vmem:[%s3 + $0x78] sm:$0xff]
    %525 = vmatprep.subr.mxu0 0.0
    %526 = vmatpush1.msra.mxu0 %v509
    %527 = vmatprep.subr.mxu0 0.0
    %528 = vmatpush1.msra.mxu0 %v510
    %529 = vmatprep.subr.mxu0 0.0
    %530 = vmatpush1.msra.mxu0 %v511
    %531 = vmatprep.subr.mxu0 0.0
    %532 = vmatpush1.msra.mxu0 %v512
    %533 = vmatprep.subr.mxu0 0.0
    %534 = vmatpush1.msra.mxu0 %v513
    %535 = vmatprep.subr.mxu0 0.0
    %536 = vmatpush1.msra.mxu0 %v514
    %537 = vmatprep.subr.mxu0 0.0
    %538 = vmatpush1.msra.mxu0 %v515
    %539 = vmatprep.subr.mxu0 0.0
    %540 = vmatpush1.msra.mxu0 %v516
    %541 = vmatprep.subr.mxu0 0.0
    %542 = vmatpush1.msra.mxu0 %v517
    %543 = vmatprep.subr.mxu0 0.0
    %544 = vmatpush1.msra.mxu0 %v518
    %545 = vmatprep.subr.mxu0 0.0
    %546 = vmatpush1.msra.mxu0 %v519
    %547 = vmatprep.subr.mxu0 0.0
    %548 = vmatpush1.msra.mxu0 %v520
    %549 = vmatprep.subr.mxu0 0.0
    %550 = vmatpush1.msra.mxu0 %v521
    %551 = vmatprep.subr.mxu0 0.0
    %552 = vmatpush1.msra.mxu0 %v522
    %553 = vmatprep.subr.mxu0 0.0
    %554 = vmatpush1.msra.mxu0 %v523
    %555 = vmatprep.subr.mxu0 0.0
    %556 = vmatpush1.msra.mxu0 %v524
    %557 = vmatprep.subr.mxu0 0.0
    %558 = vmatpush1.msra.mxu0 0.0
    %559 = vmatprep.subr.mxu0 0.0
    %560 = vmatpush1.msra.mxu0 0.0
    %561 = vmatprep.subr.mxu0 0.0
    %562 = vmatpush1.msra.mxu0 0.0
    %563 = vmatprep.subr.mxu0 0.0
    %564 = vmatpush1.msra.mxu0 0.0
    %565 = vmatprep.subr.mxu0 0.0
    %566 = vmatpush1.msra.mxu0 0.0
    %567 = vmatprep.subr.mxu0 0.0
    %568 = vmatpush1.msra.mxu0 0.0
    %569 = vmatprep.subr.mxu0 0.0
    %570 = vmatpush1.msra.mxu0 0.0
    %571 = vmatprep.subr.mxu0 0.0
    %572 = vmatpush1.msra.mxu0 0.0
    %573 = vmatprep.subr.mxu0 0.0
    %574 = vmatpush1.msra.mxu0 0.0
    %575 = vmatprep.subr.mxu0 0.0
    %576 = vmatpush1.msra.mxu0 0.0
    %577 = vmatprep.subr.mxu0 0.0
    %578 = vmatpush1.msra.mxu0 0.0
    %579 = vmatprep.subr.mxu0 0.0
    %580 = vmatpush1.msra.mxu0 0.0
    %581 = vmatprep.subr.mxu0 0.0
    %582 = vmatpush1.msra.mxu0 0.0
    %583 = vmatprep.subr.mxu0 0.0
    %584 = vmatpush1.msra.mxu0 0.0
    %585 = vmatprep.subr.mxu0 0.0
    %586 = vmatpush1.msra.mxu0 0.0
    %587 = vmatprep.subr.mxu0 0.0
    %588 = vmatpush1.msra.mxu0 0.0
    %589 = vmatprep.mubr.f32.mxu0 0.0
    %590 = vmatmul.mubr.f32.gmra.mrb[0].mxu0 %v503
    %v591 = vpop.f32.mrb[0].mxu0
    %v592 = vadd.f32 0.0, %v591
    %v593 = vpop.f32.mrb[0].mxu0
    %594 = vmatprep.mubr.f32.mxu0 0.0
    %595 = vmatmul.mubr.f32.gmra.mrb[0].mxu0 %v504
    %v596 = vpop.f32.mrb[0].mxu0
    %v597 = vadd.f32 0.0, %v596
    %v598 = vpop.f32.mrb[0].mxu0
    %599 = vmatprep.mubr.f32.mxu0 0.0
    %600 = vmatmul.mubr.f32.gmra.mrb[0].mxu0 %v505
    %v601 = vpop.f32.mrb[0].mxu0
    %v602 = vadd.f32 0.0, %v601
    %v603 = vpop.f32.mrb[0].mxu0
    %604 = vmatprep.mubr.f32.mxu0 0.0
    %605 = vmatmul.mubr.f32.gmra.mrb[0].mxu0 %v506
    %v606 = vpop.f32.mrb[0].mxu0
    %v607 = vadd.f32 0.0, %v606
    %v608 = vpop.f32.mrb[0].mxu0
    %609 = vdwg.mxu0
    %vm610 = vcmask 261120
    %v612 = vsel %vm610, %v507, 0
    %v615 = vsel %vm610, %v508, 0
    %617 = vmatprep.subr.mxu0 0.0
    %618 = vmatpush1.msra.mxu0 %v592
    %619 = vmatprep.subr.mxu0 0.0
    %620 = vmatpush1.msra.mxu0 %v597
    %621 = vmatprep.subr.mxu0 0.0
    %622 = vmatpush1.msra.mxu0 %v602
    %623 = vmatprep.subr.mxu0 0.0
    %624 = vmatpush1.msra.mxu0 %v607
    %625 = vmatprep.subr.mxu0 0.0
    %626 = vmatpush1.msra.mxu0 0.0
    %627 = vmatprep.subr.mxu0 0.0
    %628 = vmatpush1.msra.mxu0 0.0
    %629 = vmatprep.subr.mxu0 0.0
    %630 = vmatpush1.msra.mxu0 0.0
    %631 = vmatprep.subr.mxu0 0.0
    %632 = vmatpush1.msra.mxu0 0.0
    %633 = vmatprep.subr.mxu0 0.0
    %634 = vmatpush1.msra.mxu0 0.0
    %635 = vmatprep.subr.mxu0 0.0
    %636 = vmatpush1.msra.mxu0 0.0
    %637 = vmatprep.subr.mxu0 0.0
    %638 = vmatpush1.msra.mxu0 0.0
    %639 = vmatprep.subr.mxu0 0.0
    %640 = vmatpush1.msra.mxu0 0.0
    %641 = vmatprep.subr.mxu0 0.0
    %642 = vmatpush1.msra.mxu0 0.0
    %643 = vmatprep.subr.mxu0 0.0
    %644 = vmatpush1.msra.mxu0 0.0
    %645 = vmatprep.subr.mxu0 0.0
    %646 = vmatpush1.msra.mxu0 0.0
    %647 = vmatprep.subr.mxu0 0.0
    %648 = vmatpush1.msra.mxu0 0.0
    %649 = vmatprep.subr.mxu0 0.0
    %650 = vmatpush1.msra.mxu0 0.0
    %651 = vmatprep.subr.mxu0 0.0
    %652 = vmatpush1.msra.mxu0 0.0
    %653 = vmatprep.subr.mxu0 0.0
    %654 = vmatpush1.msra.mxu0 0.0
    %655 = vmatprep.subr.mxu0 0.0
    %656 = vmatpush1.msra.mxu0 0.0
    %657 = vmatprep.subr.mxu0 0.0
    %658 = vmatpush1.msra.mxu0 0.0
    %659 = vmatprep.subr.mxu0 0.0
    %660 = vmatpush1.msra.mxu0 0.0
    %661 = vmatprep.subr.mxu0 0.0
    %662 = vmatpush1.msra.mxu0 0.0
    %663 = vmatprep.subr.mxu0 0.0
    %664 = vmatpush1.msra.mxu0 0.0
    %665 = vmatprep.subr.mxu0 0.0
    %666 = vmatpush1.msra.mxu0 0.0
    %667 = vmatprep.subr.mxu0 0.0
    %668 = vmatpush1.msra.mxu0 0.0
    %669 = vmatprep.subr.mxu0 0.0
    %670 = vmatpush1.msra.mxu0 0.0
    %671 = vmatprep.subr.mxu0 0.0
    %672 = vmatpush1.msra.mxu0 0.0
    %673 = vmatprep.subr.mxu0 0.0
    %674 = vmatpush1.msra.mxu0 0.0
    %675 = vmatprep.subr.mxu0 0.0
    %676 = vmatpush1.msra.mxu0 0.0
    %677 = vmatprep.subr.mxu0 0.0
    %678 = vmatpush1.msra.mxu0 0.0
    %679 = vmatprep.subr.mxu0 0.0
    %680 = vmatpush1.msra.mxu0 0.0
    %681 = vmatprep.mubr.f32.mxu0 0.0
    %682 = vmatmul.mubr.f32.gmra.mrb[0].mxu0 %v612
    %v683 = vpop.f32.mrb[0].mxu0
    %v684 = vadd.f32 0.0, %v683
    %v685 = vpop.f32.mrb[0].mxu0
    %686 = vmatprep.mubr.f32.mxu0 0.0
    %687 = vmatmul.mubr.f32.gmra.mrb[0].mxu0 %v615
    %v688 = vpop.f32.mrb[0].mxu0
    %v689 = vadd.f32 0.0, %v688
    %v690 = vpop.f32.mrb[0].mxu0
    %691 = vdwg.mxu0
    %vm692 = vcmp.lt.s32.totalorder %v44, 0
    %v693 = vsub.s32 0, %v44
    %v694 = vsel %vm692, %v693, %v44
    %v695 = vshrl.u32 %v694, 3
    %v696 = vand.u32 %v694, 7
    %v697 = vsub.s32 0, %v696
    %v698 = vsel %vm692, %v697, %v696
    %vm699 = vcmp.lt.s32.totalorder %v45, 0
    %v700 = vsub.s32 0, %v45
    %v701 = vsel %vm699, %v700, %v45
    %v702 = vshrl.u32 %v701, 3
    %v703 = vand.u32 %v701, 7
    %v704 = vsub.s32 0, %v703
    %v705 = vsel %vm699, %v704, %v703
    %vm706 = vcmp.ne.s32.totalorder %v698, 0
    %vm707 = vcmp.ne.s32.totalorder %v705, 0
    %vm708 = vcmp.lt.s32.totalorder %v698, 0
    %vm709 = vcmp.lt.s32.totalorder %v705, 0
    %vm710 = vmand %vm708, %vm706
    %vm711 = vmand %vm709, %vm707
    %v712 = vadd.s32 %v698, 8
    %v713 = vadd.s32 %v705, 8
    %v714 = vsel %vm710, %v712, %v698
    %v715 = vsel %vm711, %v713, %v705
    %vm716 = vcmp.gt.s32.totalorder %v714, 0
    %vm717 = vcmp.gt.s32.totalorder %v715, 0
    %v718 = vsel %vm716, 1, 0
    %v719 = vsel %vm717, 1, 0
    %v720 = vcvt.s32.f32 %v718
    %v721 = vcvt.s32.f32 %v719
    %vm722 = vcmp.lt.s32.totalorder %v714, 7
    %vm723 = vcmp.lt.s32.totalorder %v715, 7
    %v724 = vsel %vm722, 1, 0
    %v725 = vsel %vm723, 1, 0
    %v726 = vcvt.s32.f32 %v724
    %v727 = vcvt.s32.f32 %v725
    %v728 = vrot.slane %v684, 7
    %v729 = vrot.slane %v689, 7
    %v730 = vsel %vm124, %v728, %v729
    %v731 = vsel %vm124, %v729, %v728
    %v732 = vmul.f32 %v731, %v720
    %v733 = vmul.f32 %v730, %v721
    %v734 = vrot.slane %v684, 1
    %v735 = vrot.slane %v689, 1
    %v736 = vsel %vm137, %v734, %v735
    %v737 = vsel %vm137, %v735, %v734
    %v738 = vmul.f32 %v736, %v726
    %v739 = vmul.f32 %v737, %v727
    %v740 = vld [vmem:[%s5] sm:$0xff]
    %v741 = vld [vmem:[%s5 + $0x8] sm:$0xff]
    %v742 = vld [vmem:[%s5 + $0x10] sm:$0xff]
    %v743 = vld [vmem:[%s5 + $0x18] sm:$0xff]
    %v744 = vld [vmem:[%s5 + $0x20] sm:$0xff]
    %v745 = vld [vmem:[%s5 + $0x28] sm:$0xff]
    %v746 = vld [vmem:[%s5 + $0x30] sm:$0xff]
    %v747 = vld [vmem:[%s5 + $0x38] sm:$0xff]
    %v748 = vld [vmem:[%s5 + $0x40] sm:$0xff]
    %v749 = vld [vmem:[%s5 + $0x48] sm:$0xff]
    %v750 = vld [vmem:[%s5 + $0x50] sm:$0xff]
    %v751 = vld [vmem:[%s5 + $0x58] sm:$0xff]
    %v752 = vld [vmem:[%s5 + $0x60] sm:$0xff]
    %v753 = vld [vmem:[%s5 + $0x68] sm:$0xff]
    %v754 = vld [vmem:[%s5 + $0x70] sm:$0xff]
    %v755 = vld [vmem:[%s5 + $0x78] sm:$0xff]
    %s756 = scalar_lea.vmem %s5, 128
    %v757 = vld [vmem:[%s756] sm:$0xff]
    %v758 = vld [vmem:[%s756 + $0x8] sm:$0xff]
    %v759 = vld [vmem:[%s756 + $0x10] sm:$0xff]
    %v760 = vld [vmem:[%s756 + $0x18] sm:$0xff]
    %v761 = vld [vmem:[%s756 + $0x20] sm:$0xff]
    %v762 = vld [vmem:[%s756 + $0x28] sm:$0xff]
    %v763 = vld [vmem:[%s756 + $0x30] sm:$0xff]
    %v764 = vld [vmem:[%s756 + $0x38] sm:$0xff]
    %v765 = vld [vmem:[%s756 + $0x40] sm:$0xff]
    %v766 = vld [vmem:[%s756 + $0x48] sm:$0xff]
    %v767 = vld [vmem:[%s756 + $0x50] sm:$0xff]
    %v768 = vld [vmem:[%s756 + $0x58] sm:$0xff]
    %v769 = vld [vmem:[%s756 + $0x60] sm:$0xff]
    %v770 = vld [vmem:[%s756 + $0x68] sm:$0xff]
    %v771 = vld [vmem:[%s756 + $0x70] sm:$0xff]
    %v772 = vld [vmem:[%s756 + $0x78] sm:$0xff]
    %v774 = vsel %vm163, %v684, 0
    %v777 = vsel %vm163, %v689, 0
    %779 = vmatprep.subr.mxu0 %v758
    %780 = vmatpush1.msra.mxu0 %v757
    %781 = vmatprep.subr.mxu0 %v760
    %782 = vmatpush1.msra.mxu0 %v759
    %783 = vmatprep.subr.mxu0 %v762
    %784 = vmatpush1.msra.mxu0 %v761
    %785 = vmatprep.subr.mxu0 %v764
    %786 = vmatpush1.msra.mxu0 %v763
    %787 = vmatprep.subr.mxu0 %v766
    %788 = vmatpush1.msra.mxu0 %v765
    %789 = vmatprep.subr.mxu0 %v768
    %790 = vmatpush1.msra.mxu0 %v767
    %791 = vmatprep.subr.mxu0 %v770
    %792 = vmatpush1.msra.mxu0 %v769
    %793 = vmatprep.subr.mxu0 %v772
    %794 = vmatpush1.msra.mxu0 %v771
    %795 = vmatprep.subr.mxu0 0.0
    %796 = vmatpush1.msra.mxu0 0.0
    %797 = vmatprep.subr.mxu0 0.0
    %798 = vmatpush1.msra.mxu0 0.0
    %799 = vmatprep.subr.mxu0 0.0
    %800 = vmatpush1.msra.mxu0 0.0
    %801 = vmatprep.subr.mxu0 0.0
    %802 = vmatpush1.msra.mxu0 0.0
    %803 = vmatprep.subr.mxu0 0.0
    %804 = vmatpush1.msra.mxu0 0.0
    %805 = vmatprep.subr.mxu0 0.0
    %806 = vmatpush1.msra.mxu0 0.0
    %807 = vmatprep.subr.mxu0 0.0
    %808 = vmatpush1.msra.mxu0 0.0
    %809 = vmatprep.subr.mxu0 0.0
    %810 = vmatpush1.msra.mxu0 0.0
    %811 = vmatprep.subr.mxu0 0.0
    %812 = vmatpush1.msra.mxu0 0.0
    %813 = vmatprep.subr.mxu0 0.0
    %814 = vmatpush1.msra.mxu0 0.0
    %815 = vmatprep.subr.mxu0 0.0
    %816 = vmatpush1.msra.mxu0 0.0
    %817 = vmatprep.subr.mxu0 0.0
    %818 = vmatpush1.msra.mxu0 0.0
    %819 = vmatprep.subr.mxu0 0.0
    %820 = vmatpush1.msra.mxu0 0.0
    %821 = vmatprep.subr.mxu0 0.0
    %822 = vmatpush1.msra.mxu0 0.0
    %823 = vmatprep.subr.mxu0 0.0
    %824 = vmatpush1.msra.mxu0 0.0
    %825 = vmatprep.subr.mxu0 0.0
    %826 = vmatpush1.msra.mxu0 0.0
    %827 = vmatprep.subr.mxu0 0.0
    %828 = vmatpush1.msra.mxu0 0.0
    %829 = vmatprep.subr.mxu0 0.0
    %830 = vmatpush1.msra.mxu0 0.0
    %831 = vmatprep.subr.mxu0 0.0
    %832 = vmatpush1.msra.mxu0 0.0
    %833 = vmatprep.subr.mxu0 0.0
    %834 = vmatpush1.msra.mxu0 0.0
    %835 = vmatprep.subr.mxu0 0.0
    %836 = vmatpush1.msra.mxu0 0.0
    %837 = vmatprep.subr.mxu0 0.0
    %838 = vmatpush1.msra.mxu0 0.0
    %839 = vmatprep.subr.mxu0 0.0
    %840 = vmatpush1.msra.mxu0 0.0
    %841 = vmatprep.subr.mxu0 0.0
    %842 = vmatpush1.msra.mxu0 0.0
    %843 = vmatprep.mubr.f32.mxu0 0.0
    %844 = vmatmul.mubr.f32.gmra.mrb[0].mxu0 %v774
    %v845 = vpop.f32.mrb[0].mxu0
    %v846 = vadd.f32 0.0, %v845
    %v847 = vpop.f32.mrb[0].mxu0
    %v848 = vadd.f32 0.0, %v847
    %849 = vmatprep.mubr.f32.mxu0 0.0
    %850 = vmatmul.mubr.f32.gmra.mrb[0].mxu0 %v777
    %v851 = vpop.f32.mrb[0].mxu0
    %v852 = vadd.f32 0.0, %v851
    %v853 = vpop.f32.mrb[0].mxu0
    %v854 = vadd.f32 0.0, %v853
    %855 = vdwg.mxu0
    %v857 = vsel %vm163, %v732, 0
    %v860 = vsel %vm163, %v733, 0
    %862 = vmatprep.subr.mxu0 %v741
    %863 = vmatpush1.msra.mxu0 %v740
    %864 = vmatprep.subr.mxu0 %v743
    %865 = vmatpush1.msra.mxu0 %v742
    %866 = vmatprep.subr.mxu0 %v745
    %867 = vmatpush1.msra.mxu0 %v744
    %868 = vmatprep.subr.mxu0 %v747
    %869 = vmatpush1.msra.mxu0 %v746
    %870 = vmatprep.subr.mxu0 %v749
    %871 = vmatpush1.msra.mxu0 %v748
    %872 = vmatprep.subr.mxu0 %v751
    %873 = vmatpush1.msra.mxu0 %v750
    %874 = vmatprep.subr.mxu0 %v753
    %875 = vmatpush1.msra.mxu0 %v752
    %876 = vmatprep.subr.mxu0 %v755
    %877 = vmatpush1.msra.mxu0 %v754
    %878 = vmatprep.subr.mxu0 0.0
    %879 = vmatpush1.msra.mxu0 0.0
    %880 = vmatprep.subr.mxu0 0.0
    %881 = vmatpush1.msra.mxu0 0.0
    %882 = vmatprep.subr.mxu0 0.0
    %883 = vmatpush1.msra.mxu0 0.0
    %884 = vmatprep.subr.mxu0 0.0
    %885 = vmatpush1.msra.mxu0 0.0
    %886 = vmatprep.subr.mxu0 0.0
    %887 = vmatpush1.msra.mxu0 0.0
    %888 = vmatprep.subr.mxu0 0.0
    %889 = vmatpush1.msra.mxu0 0.0
    %890 = vmatprep.subr.mxu0 0.0
    %891 = vmatpush1.msra.mxu0 0.0
    %892 = vmatprep.subr.mxu0 0.0
    %893 = vmatpush1.msra.mxu0 0.0
    %894 = vmatprep.subr.mxu0 0.0
    %895 = vmatpush1.msra.mxu0 0.0
    %896 = vmatprep.subr.mxu0 0.0
    %897 = vmatpush1.msra.mxu0 0.0
    %898 = vmatprep.subr.mxu0 0.0
    %899 = vmatpush1.msra.mxu0 0.0
    %900 = vmatprep.subr.mxu0 0.0
    %901 = vmatpush1.msra.mxu0 0.0
    %902 = vmatprep.subr.mxu0 0.0
    %903 = vmatpush1.msra.mxu0 0.0
    %904 = vmatprep.subr.mxu0 0.0
    %905 = vmatpush1.msra.mxu0 0.0
    %906 = vmatprep.subr.mxu0 0.0
    %907 = vmatpush1.msra.mxu0 0.0
    %908 = vmatprep.subr.mxu0 0.0
    %909 = vmatpush1.msra.mxu0 0.0
    %910 = vmatprep.subr.mxu0 0.0
    %911 = vmatpush1.msra.mxu0 0.0
    %912 = vmatprep.subr.mxu0 0.0
    %913 = vmatpush1.msra.mxu0 0.0
    %914 = vmatprep.subr.mxu0 0.0
    %915 = vmatpush1.msra.mxu0 0.0
    %916 = vmatprep.subr.mxu0 0.0
    %917 = vmatpush1.msra.mxu0 0.0
    %918 = vmatprep.subr.mxu0 0.0
    %919 = vmatpush1.msra.mxu0 0.0
    %920 = vmatprep.subr.mxu0 0.0
    %921 = vmatpush1.msra.mxu0 0.0
    %922 = vmatprep.subr.mxu0 0.0
    %923 = vmatpush1.msra.mxu0 0.0
    %924 = vmatprep.subr.mxu0 0.0
    %925 = vmatpush1.msra.mxu0 0.0
    %926 = vmatprep.mubr.f32.mxu0 0.0
    %927 = vmatmul.mubr.f32.gmra.mrb[0].mxu0 %v857
    %v928 = vpop.f32.mrb[0].mxu0
    %v929 = vadd.f32 %v846, %v928
    %v930 = vpop.f32.mrb[0].mxu0
    %v931 = vadd.f32 %v848, %v930
    %932 = vmatprep.mubr.f32.mxu0 0.0
    %933 = vmatmul.mubr.f32.gmra.mrb[0].mxu0 %v860
    %v934 = vpop.f32.mrb[0].mxu0
    %v935 = vadd.f32 %v852, %v934
    %v936 = vpop.f32.mrb[0].mxu0
    %v937 = vadd.f32 %v854, %v936
    %938 = vdwg.mxu0
    %s939 = scalar_lea.vmem %s5, 256
    %v940 = vld [vmem:[%s939] sm:$0xff]
    %v941 = vld [vmem:[%s939 + $0x8] sm:$0xff]
    %v942 = vld [vmem:[%s939 + $0x10] sm:$0xff]
    %v943 = vld [vmem:[%s939 + $0x18] sm:$0xff]
    %v944 = vld [vmem:[%s939 + $0x20] sm:$0xff]
    %v945 = vld [vmem:[%s939 + $0x28] sm:$0xff]
    %v946 = vld [vmem:[%s939 + $0x30] sm:$0xff]
    %v947 = vld [vmem:[%s939 + $0x38] sm:$0xff]
    %v948 = vld [vmem:[%s939 + $0x40] sm:$0xff]
    %v949 = vld [vmem:[%s939 + $0x48] sm:$0xff]
    %v950 = vld [vmem:[%s939 + $0x50] sm:$0xff]
    %v951 = vld [vmem:[%s939 + $0x58] sm:$0xff]
    %v952 = vld [vmem:[%s939 + $0x60] sm:$0xff]
    %v953 = vld [vmem:[%s939 + $0x68] sm:$0xff]
    %v954 = vld [vmem:[%s939 + $0x70] sm:$0xff]
    %v955 = vld [vmem:[%s939 + $0x78] sm:$0xff]
    %v957 = vsel %vm163, %v738, 0
    %v960 = vsel %vm163, %v739, 0
    %962 = vmatprep.subr.mxu0 %v941
    %963 = vmatpush1.msra.mxu0 %v940
    %964 = vmatprep.subr.mxu0 %v943
    %965 = vmatpush1.msra.mxu0 %v942
    %966 = vmatprep.subr.mxu0 %v945
    %967 = vmatpush1.msra.mxu0 %v944
    %968 = vmatprep.subr.mxu0 %v947
    %969 = vmatpush1.msra.mxu0 %v946
    %970 = vmatprep.subr.mxu0 %v949
    %971 = vmatpush1.msra.mxu0 %v948
    %972 = vmatprep.subr.mxu0 %v951
    %973 = vmatpush1.msra.mxu0 %v950
    %974 = vmatprep.subr.mxu0 %v953
    %975 = vmatpush1.msra.mxu0 %v952
    %976 = vmatprep.subr.mxu0 %v955
    %977 = vmatpush1.msra.mxu0 %v954
    %978 = vmatprep.subr.mxu0 0.0
    %979 = vmatpush1.msra.mxu0 0.0
    %980 = vmatprep.subr.mxu0 0.0
    %981 = vmatpush1.msra.mxu0 0.0
    %982 = vmatprep.subr.mxu0 0.0
    %983 = vmatpush1.msra.mxu0 0.0
    %984 = vmatprep.subr.mxu0 0.0
    %985 = vmatpush1.msra.mxu0 0.0
    %986 = vmatprep.subr.mxu0 0.0
    %987 = vmatpush1.msra.mxu0 0.0
    %988 = vmatprep.subr.mxu0 0.0
    %989 = vmatpush1.msra.mxu0 0.0
    %990 = vmatprep.subr.mxu0 0.0
    %991 = vmatpush1.msra.mxu0 0.0
    %992 = vmatprep.subr.mxu0 0.0
    %993 = vmatpush1.msra.mxu0 0.0
    %994 = vmatprep.subr.mxu0 0.0
    %995 = vmatpush1.msra.mxu0 0.0
    %996 = vmatprep.subr.mxu0 0.0
    %997 = vmatpush1.msra.mxu0 0.0
    %998 = vmatprep.subr.mxu0 0.0
    %999 = vmatpush1.msra.mxu0 0.0
    %1000 = vmatprep.subr.mxu0 0.0
    %1001 = vmatpush1.msra.mxu0 0.0
    %1002 = vmatprep.subr.mxu0 0.0
    %1003 = vmatpush1.msra.mxu0 0.0
    %1004 = vmatprep.subr.mxu0 0.0
    %1005 = vmatpush1.msra.mxu0 0.0
    %1006 = vmatprep.subr.mxu0 0.0
    %1007 = vmatpush1.msra.mxu0 0.0
    %1008 = vmatprep.subr.mxu0 0.0
    %1009 = vmatpush1.msra.mxu0 0.0
    %1010 = vmatprep.subr.mxu0 0.0
    %1011 = vmatpush1.msra.mxu0 0.0
    %1012 = vmatprep.subr.mxu0 0.0
    %1013 = vmatpush1.msra.mxu0 0.0
    %1014 = vmatprep.subr.mxu0 0.0
    %1015 = vmatpush1.msra.mxu0 0.0
    %1016 = vmatprep.subr.mxu0 0.0
    %1017 = vmatpush1.msra.mxu0 0.0
    %1018 = vmatprep.subr.mxu0 0.0
    %1019 = vmatpush1.msra.mxu0 0.0
    %1020 = vmatprep.subr.mxu0 0.0
    %1021 = vmatpush1.msra.mxu0 0.0
    %1022 = vmatprep.subr.mxu0 0.0
    %1023 = vmatpush1.msra.mxu0 0.0
    %1024 = vmatprep.subr.mxu0 0.0
    %1025 = vmatpush1.msra.mxu0 0.0
    %1026 = vmatprep.mubr.f32.mxu0 0.0
    %1027 = vmatmul.mubr.f32.gmra.mrb[0].mxu0 %v957
    %v1028 = vpop.f32.mrb[0].mxu0
    %v1029 = vadd.f32 0.0, %v1028
    %v1030 = vpop.f32.mrb[0].mxu0
    %v1031 = vadd.f32 0.0, %v1030
    %1032 = vmatprep.mubr.f32.mxu0 0.0
    %1033 = vmatmul.mubr.f32.gmra.mrb[0].mxu0 %v960
    %v1034 = vpop.f32.mrb[0].mxu0
    %v1035 = vadd.f32 0.0, %v1034
    %v1036 = vpop.f32.mrb[0].mxu0
    %v1037 = vadd.f32 0.0, %v1036
    %1038 = vdwg.mxu0
    %v1039 = vadd.f32 %v929, %v1029
    %v1040 = vadd.f32 %v931, %v1031
    %v1041 = vadd.f32 %v935, %v1035
    %v1042 = vadd.f32 %v937, %v1037
    %v1043 = vld [vmem:[%s6] sm:$0x3]
    %v1045 = vlaneseq
    %v1046 = vshrl.u32 %v1045, 7
    %v1047 = vsub.s32 0, %v1046
    %v1048 = vrot.slane %v1043, %v1047
    %v1049 = vlaneseq
    %v1050 = vshrl.u32 %v1049, 7
    %v1051 = vsub.s32 1, %v1050
    %v1052 = vrot.slane %v1043, %v1051
    %v1055 = vadd.f32 %v1039, %v1048
    %v1056 = vadd.f32 %v1040, %v1052
    %v1057 = vadd.f32 %v1041, %v1048
    %v1058 = vadd.f32 %v1042, %v1052
    %v1059 = vmax.f32 %v1055, 0.0
    %v1060 = vmax.f32 %v1056, 0.0
    %v1061 = vmax.f32 %v1057, 0.0
    %v1062 = vmax.f32 %v1058, 0.0
    %v1063 = vrot.slane %v1059, 1
    %v1064 = vrot.slane %v1060, 1
    %v1065 = vrot.slane %v1061, 1
    %v1066 = vrot.slane %v1062, 1
    %v1067 = vsel %vm137, %v1063, %v1065
    %v1068 = vsel %vm137, %v1064, %v1066
    %v1069 = vsel %vm137, %v1065, %v1063
    %v1070 = vsel %vm137, %v1066, %v1064
    %v1071 = vmax.f32 %v1059, %v1067
    %v1072 = vmax.f32 %v1060, %v1068
    %v1073 = vmax.f32 %v1061, %v1069
    %v1074 = vmax.f32 %v1062, %v1070
    %1075 = vrot.lane.b32.xlu0 %v1071, 96
    %v1076 = vpop.permute.xlu0 %1075
    %1077 = vrot.lane.b32.xlu0 %v1073, 96
    %v1078 = vpop.permute.xlu0 %1077
    %1079 = vrot.lane.b32.xlu0 %v1072, 96
    %v1080 = vpop.permute.xlu0 %1079
    %1081 = vrot.lane.b32.xlu0 %v1074, 96
    %v1082 = vpop.permute.xlu0 %1081
    %v1083 = vlaneseq
    %v1084 = vand.u32 %v1083, 127
    %vm1085 = vcmp.lt.s32.totalorder %v1084, 96
    %v1086 = vsel %vm1085, %v1076, %v1080
    %v1087 = vsel %vm1085, %v1078, %v1082
    %v1088 = vsel %vm1085, %v1080, %v1076
    %v1089 = vsel %vm1085, %v1082, %v1078
    %v1090 = vmax.f32 %v1071, %v1086
    %v1091 = vmax.f32 %v1072, %v1088
    %v1092 = vmax.f32 %v1073, %v1087
    %v1093 = vmax.f32 %v1074, %v1089
    %v1094 = vld [vmem:[%s8] sm:$0x3]
    %v1095 = vld [vmem:[%s7] sm:$0xff]
    %v1096 = vld [vmem:[%s7 + $0x8] sm:$0xff]
    %v1097 = vld [vmem:[%s7 + $0x10] sm:$0xff]
    %v1098 = vld [vmem:[%s7 + $0x18] sm:$0xff]
    %v1099 = vld [vmem:[%s7 + $0x20] sm:$0xff]
    %v1100 = vld [vmem:[%s7 + $0x28] sm:$0xff]
    %v1101 = vld [vmem:[%s7 + $0x30] sm:$0xff]
    %v1102 = vld [vmem:[%s7 + $0x38] sm:$0xff]
    %v1103 = vld [vmem:[%s7 + $0x40] sm:$0xff]
    %v1104 = vld [vmem:[%s7 + $0x48] sm:$0xff]
    %v1105 = vld [vmem:[%s7 + $0x50] sm:$0xff]
    %v1106 = vld [vmem:[%s7 + $0x58] sm:$0xff]
    %v1107 = vld [vmem:[%s7 + $0x60] sm:$0xff]
    %v1108 = vld [vmem:[%s7 + $0x68] sm:$0xff]
    %v1109 = vld [vmem:[%s7 + $0x70] sm:$0xff]
    %v1110 = vld [vmem:[%s7 + $0x78] sm:$0xff]
    %v1111 = vld [vmem:[%s7 + $0x80] sm:$0xff]
    %v1112 = vld [vmem:[%s7 + $0x88] sm:$0xff]
    %v1113 = vld [vmem:[%s7 + $0x90] sm:$0xff]
    %v1114 = vld [vmem:[%s7 + $0x98] sm:$0xff]
    %v1115 = vld [vmem:[%s7 + $0xa0] sm:$0xff]
    %v1116 = vld [vmem:[%s7 + $0xa8] sm:$0xff]
    %v1117 = vld [vmem:[%s7 + $0xb0] sm:$0xff]
    %v1118 = vld [vmem:[%s7 + $0xb8] sm:$0xff]
    %v1119 = vld [vmem:[%s7 + $0xc0] sm:$0xff]
    %v1120 = vld [vmem:[%s7 + $0xc8] sm:$0xff]
    %v1121 = vld [vmem:[%s7 + $0xd0] sm:$0xff]
    %v1122 = vld [vmem:[%s7 + $0xd8] sm:$0xff]
    %v1123 = vld [vmem:[%s7 + $0xe0] sm:$0xff]
    %v1124 = vld [vmem:[%s7 + $0xe8] sm:$0xff]
    %v1125 = vld [vmem:[%s7 + $0xf0] sm:$0xff]
    %v1126 = vld [vmem:[%s7 + $0xf8] sm:$0xff]
    %1127 = vmatprep.subr.mxu0 0.0
    %1128 = vmatpush1.msra.mxu0 %v1095
    %1129 = vmatprep.subr.mxu0 0.0
    %1130 = vmatpush1.msra.mxu0 %v1096
    %1131 = vmatprep.subr.mxu0 0.0
    %1132 = vmatpush1.msra.mxu0 %v1097
    %1133 = vmatprep.subr.mxu0 0.0
    %1134 = vmatpush1.msra.mxu0 %v1098
    %1135 = vmatprep.subr.mxu0 0.0
    %1136 = vmatpush1.msra.mxu0 %v1099
    %1137 = vmatprep.subr.mxu0 0.0
    %1138 = vmatpush1.msra.mxu0 %v1100
    %1139 = vmatprep.subr.mxu0 0.0
    %1140 = vmatpush1.msra.mxu0 %v1101
    %1141 = vmatprep.subr.mxu0 0.0
    %1142 = vmatpush1.msra.mxu0 %v1102
    %1143 = vmatprep.subr.mxu0 0.0
    %1144 = vmatpush1.msra.mxu0 %v1103
    %1145 = vmatprep.subr.mxu0 0.0
    %1146 = vmatpush1.msra.mxu0 %v1104
    %1147 = vmatprep.subr.mxu0 0.0
    %1148 = vmatpush1.msra.mxu0 %v1105
    %1149 = vmatprep.subr.mxu0 0.0
    %1150 = vmatpush1.msra.mxu0 %v1106
    %1151 = vmatprep.subr.mxu0 0.0
    %1152 = vmatpush1.msra.mxu0 %v1107
    %1153 = vmatprep.subr.mxu0 0.0
    %1154 = vmatpush1.msra.mxu0 %v1108
    %1155 = vmatprep.subr.mxu0 0.0
    %1156 = vmatpush1.msra.mxu0 %v1109
    %1157 = vmatprep.subr.mxu0 0.0
    %1158 = vmatpush1.msra.mxu0 %v1110
    %1159 = vmatprep.subr.mxu0 0.0
    %1160 = vmatpush1.msra.mxu0 %v1111
    %1161 = vmatprep.subr.mxu0 0.0
    %1162 = vmatpush1.msra.mxu0 %v1112
    %1163 = vmatprep.subr.mxu0 0.0
    %1164 = vmatpush1.msra.mxu0 %v1113
    %1165 = vmatprep.subr.mxu0 0.0
    %1166 = vmatpush1.msra.mxu0 %v1114
    %1167 = vmatprep.subr.mxu0 0.0
    %1168 = vmatpush1.msra.mxu0 %v1115
    %1169 = vmatprep.subr.mxu0 0.0
    %1170 = vmatpush1.msra.mxu0 %v1116
    %1171 = vmatprep.subr.mxu0 0.0
    %1172 = vmatpush1.msra.mxu0 %v1117
    %1173 = vmatprep.subr.mxu0 0.0
    %1174 = vmatpush1.msra.mxu0 %v1118
    %1175 = vmatprep.subr.mxu0 0.0
    %1176 = vmatpush1.msra.mxu0 %v1119
    %1177 = vmatprep.subr.mxu0 0.0
    %1178 = vmatpush1.msra.mxu0 %v1120
    %1179 = vmatprep.subr.mxu0 0.0
    %1180 = vmatpush1.msra.mxu0 %v1121
    %1181 = vmatprep.subr.mxu0 0.0
    %1182 = vmatpush1.msra.mxu0 %v1122
    %1183 = vmatprep.subr.mxu0 0.0
    %1184 = vmatpush1.msra.mxu0 %v1123
    %1185 = vmatprep.subr.mxu0 0.0
    %1186 = vmatpush1.msra.mxu0 %v1124
    %1187 = vmatprep.subr.mxu0 0.0
    %1188 = vmatpush1.msra.mxu0 %v1125
    %1189 = vmatprep.subr.mxu0 0.0
    %1190 = vmatpush1.msra.mxu0 %v1126
    %1191 = vmatprep.mubr.f32.mxu0 %v1091
    %1192 = vmatmul.mubr.f32.gmra.mrb[0].mxu0 %v1090
    %v1193 = vpop.f32.mrb[0].mxu0
    %v1194 = vadd.f32 0.0, %v1193
    %v1195 = vpop.f32.mrb[0].mxu0
    %1196 = vmatprep.mubr.f32.mxu0 %v1093
    %1197 = vmatmul.mubr.f32.gmra.mrb[0].mxu0 %v1092
    %v1198 = vpop.f32.mrb[0].mxu0
    %v1199 = vadd.f32 0.0, %v1198
    %v1200 = vpop.f32.mrb[0].mxu0
    %1201 = vdwg.mxu0
    %vm1202 = vcmask 130048
    %v1204 = vsel %vm1202, %v1094, 0
    %1206 = vmatprep.subr.mxu0 0.0
    %1207 = vmatpush1.msra.mxu0 %v1194
    %1208 = vmatprep.subr.mxu0 0.0
    %1209 = vmatpush1.msra.mxu0 %v1199
    %1210 = vmatprep.subr.mxu0 0.0
    %1211 = vmatpush1.msra.mxu0 0.0
    %1212 = vmatprep.subr.mxu0 0.0
    %1213 = vmatpush1.msra.mxu0 0.0
    %1214 = vmatprep.subr.mxu0 0.0
    %1215 = vmatpush1.msra.mxu0 0.0
    %1216 = vmatprep.subr.mxu0 0.0
    %1217 = vmatpush1.msra.mxu0 0.0
    %1218 = vmatprep.subr.mxu0 0.0
    %1219 = vmatpush1.msra.mxu0 0.0
    %1220 = vmatprep.subr.mxu0 0.0
    %1221 = vmatpush1.msra.mxu0 0.0
    %1222 = vmatprep.subr.mxu0 0.0
    %1223 = vmatpush1.msra.mxu0 0.0
    %1224 = vmatprep.subr.mxu0 0.0
    %1225 = vmatpush1.msra.mxu0 0.0
    %1226 = vmatprep.subr.mxu0 0.0
    %1227 = vmatpush1.msra.mxu0 0.0
    %1228 = vmatprep.subr.mxu0 0.0
    %1229 = vmatpush1.msra.mxu0 0.0
    %1230 = vmatprep.subr.mxu0 0.0
    %1231 = vmatpush1.msra.mxu0 0.0
    %1232 = vmatprep.subr.mxu0 0.0
    %1233 = vmatpush1.msra.mxu0 0.0
    %1234 = vmatprep.subr.mxu0 0.0
    %1235 = vmatpush1.msra.mxu0 0.0
    %1236 = vmatprep.subr.mxu0 0.0
    %1237 = vmatpush1.msra.mxu0 0.0
    %1238 = vmatprep.subr.mxu0 0.0
    %1239 = vmatpush1.msra.mxu0 0.0
    %1240 = vmatprep.subr.mxu0 0.0
    %1241 = vmatpush1.msra.mxu0 0.0
    %1242 = vmatprep.subr.mxu0 0.0
    %1243 = vmatpush1.msra.mxu0 0.0
    %1244 = vmatprep.subr.mxu0 0.0
    %1245 = vmatpush1.msra.mxu0 0.0
    %1246 = vmatprep.subr.mxu0 0.0
    %1247 = vmatpush1.msra.mxu0 0.0
    %1248 = vmatprep.subr.mxu0 0.0
    %1249 = vmatpush1.msra.mxu0 0.0
    %1250 = vmatprep.subr.mxu0 0.0
    %1251 = vmatpush1.msra.mxu0 0.0
    %1252 = vmatprep.subr.mxu0 0.0
    %1253 = vmatpush1.msra.mxu0 0.0
    %1254 = vmatprep.subr.mxu0 0.0
    %1255 = vmatpush1.msra.mxu0 0.0
    %1256 = vmatprep.subr.mxu0 0.0
    %1257 = vmatpush1.msra.mxu0 0.0
    %1258 = vmatprep.subr.mxu0 0.0
    %1259 = vmatpush1.msra.mxu0 0.0
    %1260 = vmatprep.subr.mxu0 0.0
    %1261 = vmatpush1.msra.mxu0 0.0
    %1262 = vmatprep.subr.mxu0 0.0
    %1263 = vmatpush1.msra.mxu0 0.0
    %1264 = vmatprep.subr.mxu0 0.0
    %1265 = vmatpush1.msra.mxu0 0.0
    %1266 = vmatprep.subr.mxu0 0.0
    %1267 = vmatpush1.msra.mxu0 0.0
    %1268 = vmatprep.subr.mxu0 0.0
    %1269 = vmatpush1.msra.mxu0 0.0
    %1270 = vmatprep.mubr.f32.mxu0 0.0
    %1271 = vmatmul.mubr.f32.gmra.mrb[0].mxu0 %v1204
    %v1272 = vpop.f32.mrb[0].mxu0
    %v1273 = vadd.f32 0.0, %v1272
    %v1274 = vpop.f32.mrb[0].mxu0
    %1275 = vdwg.mxu0
    %v1276 = vld [vmem:[%s9] sm:$0xff]
    %v1277 = vld [vmem:[%s9 + $0x8] sm:$0xff]
    %v1278 = vld [vmem:[%s9 + $0x10] sm:$0xff]
    %v1279 = vld [vmem:[%s9 + $0x18] sm:$0xff]
    %v1280 = vld [vmem:[%s9 + $0x20] sm:$0xff]
    %v1281 = vld [vmem:[%s9 + $0x28] sm:$0xff]
    %v1282 = vld [vmem:[%s9 + $0x30] sm:$0xff]
    %v1283 = vld [vmem:[%s9 + $0x38] sm:$0xff]
    %v1284 = vld [vmem:[%s9 + $0x40] sm:$0xff]
    %v1285 = vld [vmem:[%s9 + $0x48] sm:$0xff]
    %v1286 = vld [vmem:[%s9 + $0x50] sm:$0xff]
    %v1287 = vld [vmem:[%s9 + $0x58] sm:$0xff]
    %v1288 = vld [vmem:[%s9 + $0x60] sm:$0xff]
    %v1289 = vld [vmem:[%s9 + $0x68] sm:$0xff]
    %v1290 = vld [vmem:[%s9 + $0x70] sm:$0xff]
    %v1291 = vld [vmem:[%s9 + $0x78] sm:$0xff]
    %v1292 = vld [vmem:[%s10] sm:$0x1]
    %v1294 = vlaneseq
    %v1295 = vshrl.u32 %v1294, 7
    %v1296 = vsub.s32 0, %v1295
    %v1297 = vrot.slane %v1292, %v1296
    %1299 = vmatprep.subr.mxu0 0.0
    %1300 = vmatpush1.msra.mxu0 %v1276
    %1301 = vmatprep.subr.mxu0 0.0
    %1302 = vmatpush1.msra.mxu0 %v1277
    %1303 = vmatprep.subr.mxu0 0.0
    %1304 = vmatpush1.msra.mxu0 %v1278
    %1305 = vmatprep.subr.mxu0 0.0
    %1306 = vmatpush1.msra.mxu0 %v1279
    %1307 = vmatprep.subr.mxu0 0.0
    %1308 = vmatpush1.msra.mxu0 %v1280
    %1309 = vmatprep.subr.mxu0 0.0
    %1310 = vmatpush1.msra.mxu0 %v1281
    %1311 = vmatprep.subr.mxu0 0.0
    %1312 = vmatpush1.msra.mxu0 %v1282
    %1313 = vmatprep.subr.mxu0 0.0
    %1314 = vmatpush1.msra.mxu0 %v1283
    %1315 = vmatprep.subr.mxu0 0.0
    %1316 = vmatpush1.msra.mxu0 %v1284
    %1317 = vmatprep.subr.mxu0 0.0
    %1318 = vmatpush1.msra.mxu0 %v1285
    %1319 = vmatprep.subr.mxu0 0.0
    %1320 = vmatpush1.msra.mxu0 %v1286
    %1321 = vmatprep.subr.mxu0 0.0
    %1322 = vmatpush1.msra.mxu0 %v1287
    %1323 = vmatprep.subr.mxu0 0.0
    %1324 = vmatpush1.msra.mxu0 %v1288
    %1325 = vmatprep.subr.mxu0 0.0
    %1326 = vmatpush1.msra.mxu0 %v1289
    %1327 = vmatprep.subr.mxu0 0.0
    %1328 = vmatpush1.msra.mxu0 %v1290
    %1329 = vmatprep.subr.mxu0 0.0
    %1330 = vmatpush1.msra.mxu0 %v1291
    %1331 = vmatprep.subr.mxu0 0.0
    %1332 = vmatpush1.msra.mxu0 0.0
    %1333 = vmatprep.subr.mxu0 0.0
    %1334 = vmatpush1.msra.mxu0 0.0
    %1335 = vmatprep.subr.mxu0 0.0
    %1336 = vmatpush1.msra.mxu0 0.0
    %1337 = vmatprep.subr.mxu0 0.0
    %1338 = vmatpush1.msra.mxu0 0.0
    %1339 = vmatprep.subr.mxu0 0.0
    %1340 = vmatpush1.msra.mxu0 0.0
    %1341 = vmatprep.subr.mxu0 0.0
    %1342 = vmatpush1.msra.mxu0 0.0
    %1343 = vmatprep.subr.mxu0 0.0
    %1344 = vmatpush1.msra.mxu0 0.0
    %1345 = vmatprep.subr.mxu0 0.0
    %1346 = vmatpush1.msra.mxu0 0.0
    %1347 = vmatprep.subr.mxu0 0.0
    %1348 = vmatpush1.msra.mxu0 0.0
    %1349 = vmatprep.subr.mxu0 0.0
    %1350 = vmatpush1.msra.mxu0 0.0
    %1351 = vmatprep.subr.mxu0 0.0
    %1352 = vmatpush1.msra.mxu0 0.0
    %1353 = vmatprep.subr.mxu0 0.0
    %1354 = vmatpush1.msra.mxu0 0.0
    %1355 = vmatprep.subr.mxu0 0.0
    %1356 = vmatpush1.msra.mxu0 0.0
    %1357 = vmatprep.subr.mxu0 0.0
    %1358 = vmatpush1.msra.mxu0 0.0
    %1359 = vmatprep.subr.mxu0 0.0
    %1360 = vmatpush1.msra.mxu0 0.0
    %1361 = vmatprep.subr.mxu0 0.0
    %1362 = vmatpush1.msra.mxu0 0.0
    %1363 = vmatprep.mubr.f32.mxu0 0.0
    %1364 = vmatmul.mubr.f32.gmra.mrb[0].mxu0 %v1273
    %v1365 = vpop.f32.mrb[0].mxu0
    %v1366 = vadd.f32 %v1297, %v1365
    %v1367 = vpop.f32.mrb[0].mxu0
    %1368 = vdwg.mxu0
    %1369 = vst [vmem:[#allocation2] sm:$0x3] %v1366
    // Predicated region
    $region46: #{cnn_forward.1} parent=1 // pred_check
      _
    $region47: #{cnn_forward.1} parent=1 // pred_check_branch
      %1371 = sbr.rel (0) target = $region49
    $region48: #{cnn_forward.1} parent=1 // pred_region
      %s1373 = ssub.s32 32, 32
      %1374 = vsyncadd [#allocation3], %s1373
      %s1376 = sshll.u32 [#allocation2], 4
      %s1377 = int_to_ptr.vmem [resolvable:$true] %s1376
      %1379 = dma.vmem_to_hbm [thread:$0]  %s1377, 32, %s11, [#allocation3]
    $region49: #{cnn_forward.1} parent=1 // pred_fallthru
      _
    // Predicated region
    $region50: #{cnn_forward.1} parent=1 // pred_check
      _
    $region51: #{cnn_forward.1} parent=1 // pred_check_branch
      %1381 = sbr.rel (0) target = $region53
    $region52: #{cnn_forward.1} parent=1 // pred_region
      %1382 = dma.done [#allocation3], 32
    $region53: #{cnn_forward.1} parent=1 // pred_fallthru
      _
    %1383 = vsyncpa [#allocation3], 1

</llo_original>
